<compile_context>
chip_gen: v7x
topology: tpu7x:2x2x1
jax: 0.10.0
libtpu: 0.0.40
codegen_flags: <defaults>
</compile_context>

<pallas_src>
import functools

import jax
import jax.numpy as jnp
from jax.experimental import pallas as pl
from jax.experimental.pallas import tpu as pltpu


def _layer_norm(x, w, b, eps=1e-5):
    # Single-pass statistics: E[x] and E[x^2] -> var (halves the XLU reductions).
    mean = jnp.mean(x, axis=-1, keepdims=True)
    mean_sq = jnp.mean(x * x, axis=-1, keepdims=True)
    var = mean_sq - mean * mean
    return (x - mean) * jax.lax.rsqrt(var + eps) * w + b


def _block_cache_kernel(num_heads, head_dim,
                        h_ref, past_ref, mask_ref,
                        ln1_w_ref, ln1_b_ref,
                        attn_w_ref, attn_b_ref,
                        attn_proj_w_ref, attn_proj_b_ref,
                        ln2_w_ref, ln2_b_ref,
                        fc_w_ref, fc_b_ref,
                        mlp_proj_w_ref, mlp_proj_b_ref,
                        out_ref, present_ref,
                        h1_s, y_s, acc_s):
    seq, hidden = h_ref.shape
    past_len = past_ref.shape[0]
    f32 = jnp.float32
    bf16 = jnp.bfloat16
    mask_value = jnp.finfo(f32).min
    j = pl.program_id(1)                       # FFN tile index (reduction axis)

    # ---------- FFN tile 0: LN1 + fused-QKV + MQA attention + first residual ----------
    @pl.when(j == 0)
    def _attention():
        h = h_ref[...].astype(f32)
        x = _layer_norm(h, ln1_w_ref[...], ln1_b_ref[...])

        # fused QKV projection (bf16 MXU, f32 accumulation)
        qkv = jnp.dot(x.astype(bf16), attn_w_ref[...],
                      preferred_element_type=f32) + attn_b_ref[...]
        scale = 1.0 / (head_dim ** 0.5)
        q = qkv[:, :hidden] * scale            # fold 1/sqrt(d) into q: O(seq*hidden)
        kv_new = qkv[:, hidden:]               # (seq, 2*head_dim)

        # KV cache: write past rows + new rows straight into `present`
        # (no in-register concat of the whole cache).
        present_ref[pl.ds(0, past_len), :] = past_ref[...].astype(present_ref.dtype)
        present_ref[pl.ds(past_len, seq), :] = kv_new.astype(present_ref.dtype)
        kv = present_ref[...].astype(f32)      # (total, 2*head_dim)
        key = kv[:, :head_dim]
        value = kv[:, head_dim:]

        # Fused multi-query attention: stack all heads along the row axis so the
        # score matmul, the softmax pass and the value matmul each run once.
        q2 = jnp.concatenate(
            [q[:, hi * head_dim:(hi + 1) * head_dim] for hi in range(num_heads)],
            axis=0)                                               # (H*seq, head_dim)
        s = jnp.dot(q2.astype(bf16), key.T.astype(bf16),
                    preferred_element_type=f32)                   # (H*seq, total)
        mask = mask_ref[...]                                      # (seq, total)
        mask2 = jnp.concatenate([mask] * num_heads, axis=0)       # (H*seq, total)
        s = jnp.where(mask2 > 0, s, mask_value)
        s = s - jnp.max(s, axis=-1, keepdims=True)
        p = jnp.exp(s)
        p = p * pl.reciprocal(jnp.sum(p, axis=-1, keepdims=True), approx=True)
        ctx2 = jnp.dot(p.astype(bf16), value.astype(bf16),
                       preferred_element_type=f32)                # (H*seq, head_dim)
        ctx = jnp.concatenate(
            [ctx2[hi * seq:(hi + 1) * seq, :] for hi in range(num_heads)],
            axis=-1)                                              # (seq, hidden)

        attn_out = jnp.dot(ctx.astype(bf16), attn_proj_w_ref[...],
                           preferred_element_type=f32) + attn_proj_b_ref[...]
        h1 = h + attn_out                       # first residual
        h1_s[...] = h1
        y_s[...] = _layer_norm(h1, ln2_w_ref[...], ln2_b_ref[...])
        acc_s[...] = jnp.zeros_like(acc_s)

    # ---------- every FFN tile: partial c_fc -> gelu -> partial c_proj ----------
    fc = jnp.dot(y_s[...].astype(bf16), fc_w_ref[...],
                 preferred_element_type=f32) + fc_b_ref[...]
    act = jax.nn.gelu(fc, approximate=True)     # == gelu_pytorch_tanh
    acc_s[...] += jnp.dot(act.astype(bf16), mlp_proj_w_ref[...],
                          preferred_element_type=f32)

    # ---------- last FFN tile: second residual + writeback ----------
    @pl.when(j == pl.num_programs(1) - 1)
    def _finalize():
        out_ref[...] = (h1_s[...] + acc_s[...] + mlp_proj_b_ref[...]).astype(out_ref.dtype)


def block_cache_forward(hidden_states, layer_past, attention_mask, params,
                        *, num_heads, head_dim, ffn_tile=None):
    batch, seq, hidden = hidden_states.shape
    past_len = layer_past.shape[1]
    total = past_len + seq
    kv_dim = 2 * head_dim
    ffn = params["fc_w"].shape[1]

    # Tile the FFN dimension so c_fc / c_proj weights are streamed through VMEM
    # instead of held (double-buffered) fully resident.
    if ffn_tile is None:
        ffn_tile = ffn
        for cand in (2048, 1024, 512, 256, 128):
            if ffn % cand == 0:
                ffn_tile = cand
                break
    assert ffn % ffn_tile == 0
    n_ffn = ffn // ffn_tile

    bf16 = jnp.bfloat16
    # Big matmul weights live in HBM as bf16 (MXU native, half the DMA bytes);
    # biases / LN params stay f32 (tiny, added in f32).
    attn_w = params["attn_w"].astype(bf16)
    attn_proj_w = params["attn_proj_w"].astype(bf16)
    fc_w = params["fc_w"].astype(bf16)
    mlp_proj_w = params["mlp_proj_w"].astype(bf16)

    def const_spec(shape):
        nd = len(shape)
        return pl.BlockSpec(shape, lambda b, j, _nd=nd: (0,) * _nd)

    in_specs = [
        pl.BlockSpec((None, seq, hidden), lambda b, j: (b, 0, 0)),
        pl.BlockSpec((None, past_len, kv_dim), lambda b, j: (b, 0, 0)),
        # TODO(synk): the mask could be generated in-kernel (broadcasted_iota +
        # past_len) to avoid its per-batch DMA, but it is kept as an input to
        # preserve the module's forward signature.
        pl.BlockSpec((None, None, seq, total), lambda b, j: (b, 0, 0, 0)),
        const_spec(params["ln1_w"].shape),
        const_spec(params["ln1_b"].shape),
        const_spec(attn_w.shape),
        const_spec(params["attn_b"].shape),
        const_spec(attn_proj_w.shape),
        const_spec(params["attn_proj_b"].shape),
        const_spec(params["ln2_w"].shape),
        const_spec(params["ln2_b"].shape),
        pl.BlockSpec((hidden, ffn_tile), lambda b, j: (0, j)),     # fc_w tile
        pl.BlockSpec((1, ffn_tile), lambda b, j: (0, j)),          # fc_b tile
        pl.BlockSpec((ffn_tile, hidden), lambda b, j: (j, 0)),     # mlp_proj_w tile
        const_spec(params["mlp_proj_b"].shape),
    ]

    out_shape = (
        jax.ShapeDtypeStruct((batch, seq, hidden), hidden_states.dtype),
        jax.ShapeDtypeStruct((batch, total, kv_dim), hidden_states.dtype),
    )
    out_specs = (
        pl.BlockSpec((None, seq, hidden), lambda b, j: (b, 0, 0)),
        # TODO(synk): for long-context decode, pass a preallocated max-length cache
        # via input_output_aliases and write only the new `seq` rows, instead of
        # round-tripping the whole past KV every call (interface change).
        pl.BlockSpec((None, total, kv_dim), lambda b, j: (b, 0, 0)),
    )
    scratch_shapes = [
        pltpu.VMEM((seq, hidden), jnp.float32),   # h1  (first residual)
        pltpu.VMEM((seq, hidden), jnp.float32),   # ln_2(h1), reused by every FFN tile
        pltpu.VMEM((seq, hidden), jnp.float32),   # MLP output accumulator
    ]

    kernel = functools.partial(_block_cache_kernel, num_heads, head_dim)
    return pl.pallas_call(
        kernel,
        grid=(batch, n_ffn),
        in_specs=in_specs,
        out_specs=out_specs,
        out_shape=out_shape,
        scratch_shapes=scratch_shapes,
        compiler_params=pltpu.CompilerParams(
            dimension_semantics=("parallel", "arbitrary"),
            vmem_limit_bytes=64 * 1024 * 1024,
        ),
    )(hidden_states, layer_past, attention_mask,
      params["ln1_w"], params["ln1_b"],
      attn_w, params["attn_b"],
      attn_proj_w, params["attn_proj_b"],
      params["ln2_w"], params["ln2_b"],
      fc_w, params["fc_b"],
      mlp_proj_w, params["mlp_proj_b"])


def init_params(key, hidden, head_dim, ffn):
    # Deterministic synthetic parameters (no checkpoint load).
    kv_dim = 2 * head_dim
    ks = jax.random.split(key, 6)

    def lin(k, fan_in, fan_out):
        return 0.02 * jax.random.normal(k, (fan_in, fan_out), jnp.float32)

    return {
        "ln1_w": jnp.ones((1, hidden), jnp.float32),
        "ln1_b": jnp.zeros((1, hidden), jnp.float32),
        "attn_w": lin(ks[0], hidden, hidden + kv_dim),
        "attn_b": 0.02 * jax.random.normal(ks[1], (1, hidden + kv_dim), jnp.float32),
        "attn_proj_w": lin(ks[2], hidden, hidden),
        "attn_proj_b": jnp.zeros((1, hidden), jnp.float32),
        "ln2_w": jnp.ones((1, hidden), jnp.float32),
        "ln2_b": jnp.zeros((1, hidden), jnp.float32),
        "fc_w": lin(ks[3], hidden, ffn),
        "fc_b": 0.02 * jax.random.normal(ks[4], (1, ffn), jnp.float32),
        "mlp_proj_w": lin(ks[5], ffn, hidden),
        "mlp_proj_b": jnp.zeros((1, hidden), jnp.float32),
    }


def ref_forward(hidden_states, layer_past, attention_mask, params, num_heads, head_dim):
    # Pure-JAX f32 reference matching GPTBigCode block semantics (for validation).
    def ln(x, w, b):
        m = jnp.mean(x, -1, keepdims=True)
        v = jnp.mean((x - m) ** 2, -1, keepdims=True)
        return (x - m) / jnp.sqrt(v + 1e-5) * w[0] + b[0]

    h = hidden_states
    hidden = h.shape[-1]
    x = ln(h, params["ln1_w"], params["ln1_b"])
    qkv = x @ params["attn_w"] + params["attn_b"][0]
    q, kv_new = qkv[..., :hidden], qkv[..., hidden:]
    present = jnp.concatenate([layer_past, kv_new], axis=1)
    key, value = present[..., :head_dim], present[..., head_dim:]
    B, S, _ = q.shape
    qh = q.reshape(B, S, num_heads, head_dim)
    scores = jnp.einsum("bshd,btd->bhst", qh, key) / (head_dim ** 0.5)
    scores = jnp.where(attention_mask > 0, scores, jnp.finfo(jnp.float32).min)
    probs = jax.nn.softmax(scores, axis=-1)
    ctx = jnp.einsum("bhst,btd->bshd", probs, value).reshape(B, S, hidden)
    h1 = h + ctx @ params["attn_proj_w"] + params["attn_proj_b"][0]
    y = ln(h1, params["ln2_w"], params["ln2_b"])
    act = jax.nn.gelu(y @ params["fc_w"] + params["fc_b"][0], approximate=True)
    out = h1 + act @ params["mlp_proj_w"] + params["mlp_proj_b"][0]
    return out, present


if __name__ == "__main__":
    batch, seq, past_len = 2, 4, 8
    num_heads, head_dim = 8, 8
    hidden = num_heads * head_dim           # 64
    ffn = 4 * hidden                        # 256
    total = past_len + seq

    root = jax.random.PRNGKey(0)
    k1, k2, k3 = jax.random.split(root, 3)
    hidden_states = jax.random.normal(k1, (batch, seq, hidden), jnp.float32)
    layer_past = jax.random.normal(k2, (batch, past_len, 2 * head_dim), jnp.float32)
    causal = jnp.tril(jnp.ones((seq, seq), jnp.float32))
    mask_row = jnp.concatenate([jnp.ones((seq, past_len), jnp.float32), causal], axis=1)
    attention_mask = jnp.broadcast_to(
        mask_row[None, None], (batch, 1, seq, total)).astype(jnp.float32)
    params = init_params(k3, hidden, head_dim, ffn)

    out, present = block_cache_forward(
        hidden_states, layer_past, attention_mask, params,
        num_heads=num_heads, head_dim=head_dim, ffn_tile=128)   # 2 FFN tiles
    jax.block_until_ready((out, present))

    ref_out, ref_present = ref_forward(hidden_states, layer_past, attention_mask,
                                       params, num_heads, head_dim)
    # bf16 matmuls (f32 accumulation) vs. the pure-f32 reference -> loose tolerance.
    assert jnp.allclose(out, ref_out, atol=2e-2, rtol=2e-2), \
        float(jnp.max(jnp.abs(out - ref_out)))
    assert jnp.allclose(present, ref_present, atol=1e-2, rtol=1e-2), \
        float(jnp.max(jnp.abs(present - ref_present)))
    print("KERNEL_OK")
</pallas_src>

<mosaic_0001>
module attributes {stable_mosaic.version = 11 : i64} {
  func.func @_block_cache_kernel(%arg0: i32, %arg1: i32, %arg2: memref<1x4x64xf32, #tpu.memory_space<vmem>>, %arg3: memref<1x8x16xf32, #tpu.memory_space<vmem>>, %arg4: memref<1x1x4x12xf32, #tpu.memory_space<vmem>>, %arg5: memref<1x64xf32, #tpu.memory_space<vmem>>, %arg6: memref<1x64xf32, #tpu.memory_space<vmem>>, %arg7: memref<64x80xbf16, #tpu.memory_space<vmem>>, %arg8: memref<1x80xf32, #tpu.memory_space<vmem>>, %arg9: memref<64x64xbf16, #tpu.memory_space<vmem>>, %arg10: memref<1x64xf32, #tpu.memory_space<vmem>>, %arg11: memref<1x64xf32, #tpu.memory_space<vmem>>, %arg12: memref<1x64xf32, #tpu.memory_space<vmem>>, %arg13: memref<64x128xbf16, #tpu.memory_space<vmem>>, %arg14: memref<1x128xf32, #tpu.memory_space<vmem>>, %arg15: memref<128x64xbf16, #tpu.memory_space<vmem>>, %arg16: memref<1x64xf32, #tpu.memory_space<vmem>>, %arg17: memref<1x4x64xf32, #tpu.memory_space<vmem>>, %arg18: memref<1x12x16xf32, #tpu.memory_space<vmem>>, %arg19: memref<4x64xf32, #tpu.memory_space<vmem>>, %arg20: memref<4x64xf32, #tpu.memory_space<vmem>>, %arg21: memref<4x64xf32, #tpu.memory_space<vmem>>) attributes {dimension_semantics = [#tpu.dimension_semantics<parallel>, #tpu.dimension_semantics<arbitrary>], iteration_bounds = array<i64: 2, 2>, scalar_prefetch = 0 : i64, scratch_operands = 3 : i64, tpu.core_type = #tpu.core_type<tc>, window_params = [{transform_indices = @transform_0, window_bounds = array<i64: 1, 4, 64>}, {transform_indices = @transform_1, window_bounds = array<i64: 1, 8, 16>}, {transform_indices = @transform_2, window_bounds = array<i64: 1, 1, 4, 12>}, {pipeline_mode = #tpu.pipeline_mode<synchronous>, transform_indices = @transform_3, window_bounds = array<i64: 1, 64>}, {pipeline_mode = #tpu.pipeline_mode<synchronous>, transform_indices = @transform_4, window_bounds = array<i64: 1, 64>}, {pipeline_mode = #tpu.pipeline_mode<synchronous>, transform_indices = @transform_5, window_bounds = array<i64: 64, 80>}, {pipeline_mode = #tpu.pipeline_mode<synchronous>, transform_indices = @transform_6, window_bounds = array<i64: 1, 80>}, {pipeline_mode = #tpu.pipeline_mode<synchronous>, transform_indices = @transform_7, window_bounds = array<i64: 64, 64>}, {pipeline_mode = #tpu.pipeline_mode<synchronous>, transform_indices = @transform_8, window_bounds = array<i64: 1, 64>}, {pipeline_mode = #tpu.pipeline_mode<synchronous>, transform_indices = @transform_9, window_bounds = array<i64: 1, 64>}, {pipeline_mode = #tpu.pipeline_mode<synchronous>, transform_indices = @transform_10, window_bounds = array<i64: 1, 64>}, {transform_indices = @transform_11, window_bounds = array<i64: 64, 128>}, {transform_indices = @transform_12, window_bounds = array<i64: 1, 128>}, {transform_indices = @transform_13, window_bounds = array<i64: 128, 64>}, {pipeline_mode = #tpu.pipeline_mode<synchronous>, transform_indices = @transform_14, window_bounds = array<i64: 1, 64>}, {transform_indices = @transform_15, window_bounds = array<i64: 1, 4, 64>}, {transform_indices = @transform_16, window_bounds = array<i64: 1, 12, 16>}]} {
    %c0_i32 = arith.constant 0 : i32
    %0 = arith.cmpi eq, %arg1, %c0_i32 : i32
    %1 = arith.extui %0 : i1 to i32
    %c0_i32_0 = arith.constant 0 : i32
    %2 = arith.cmpi ne, %1, %c0_i32_0 : i32
    scf.if %2 {
      %c0_18 = arith.constant 0 : index
      %c0_19 = arith.constant 0 : index
      %c0_20 = arith.constant 0 : index
      %32 = vector.load %arg2[%c0_18, %c0_19, %c0_20] : memref<1x4x64xf32, #tpu.memory_space<vmem>>, vector<1x4x64xf32>
      %33 = vector.shape_cast %32 : vector<1x4x64xf32> to vector<4x64xf32>
      %c0_21 = arith.constant 0 : index
      %c0_22 = arith.constant 0 : index
      %34 = vector.load %arg5[%c0_21, %c0_22] : memref<1x64xf32, #tpu.memory_space<vmem>>, vector<1x64xf32>
      %c0_23 = arith.constant 0 : index
      %c0_24 = arith.constant 0 : index
      %35 = vector.load %arg6[%c0_23, %c0_24] : memref<1x64xf32, #tpu.memory_space<vmem>>, vector<1x64xf32>
      %cst_25 = arith.constant dense<0.000000e+00> : vector<4xf32>
      %36 = vector.multi_reduction <add>, %33, %cst_25 [1] : vector<4x64xf32> to vector<4xf32>
      %37 = vector.shape_cast %36 : vector<4xf32> to vector<4x1xf32>
      %cst_26 = arith.constant 6.400000e+01 : f32
      %38 = vector.broadcast %cst_26 : f32 to vector<4x1xf32>
      %39 = arith.divf %37, %38 : vector<4x1xf32>
      %40 = arith.mulf %33, %33 : vector<4x64xf32>
      %cst_27 = arith.constant dense<0.000000e+00> : vector<4xf32>
      %41 = vector.multi_reduction <add>, %40, %cst_27 [1] : vector<4x64xf32> to vector<4xf32>
      %42 = vector.shape_cast %41 : vector<4xf32> to vector<4x1xf32>
      %cst_28 = arith.constant 6.400000e+01 : f32
      %43 = vector.broadcast %cst_28 : f32 to vector<4x1xf32>
      %44 = arith.divf %42, %43 : vector<4x1xf32>
      %45 = arith.mulf %39, %39 : vector<4x1xf32>
      %46 = arith.subf %44, %45 : vector<4x1xf32>
      %47 = vector.broadcast %39 : vector<4x1xf32> to vector<4x64xf32>
      %48 = arith.subf %33, %47 : vector<4x64xf32>
      %cst_29 = arith.constant 9.99999974E-6 : f32
      %49 = vector.broadcast %cst_29 : f32 to vector<4x1xf32>
      %50 = arith.addf %46, %49 : vector<4x1xf32>
      %51 = math.rsqrt %50 : vector<4x1xf32>
      %52 = vector.broadcast %51 : vector<4x1xf32> to vector<4x64xf32>
      %53 = arith.mulf %48, %52 : vector<4x64xf32>
      %54 = vector.broadcast %34 : vector<1x64xf32> to vector<4x64xf32>
      %55 = arith.mulf %53, %54 : vector<4x64xf32>
      %56 = vector.broadcast %35 : vector<1x64xf32> to vector<4x64xf32>
      %57 = arith.addf %55, %56 : vector<4x64xf32>
      %58 = arith.truncf %57 : vector<4x64xf32> to vector<4x64xbf16>
      %c0_30 = arith.constant 0 : index
      %c0_31 = arith.constant 0 : index
      %59 = vector.load %arg7[%c0_30, %c0_31] : memref<64x80xbf16, #tpu.memory_space<vmem>>, vector<64x80xbf16>
      %cst_32 = arith.constant dense<0.000000e+00> : vector<4x80xf32>
      %60 = tpu.matmul %58, %59, %cst_32 {dimension_numbers = #tpu.dot_dimension_numbers<[1], [0], [0], [1], [0, 0, 1, 1], [], []>} : vector<4x64xbf16>, vector<64x80xbf16>, vector<4x80xf32> -> vector<4x80xf32>
      %c0_33 = arith.constant 0 : index
      %c0_34 = arith.constant 0 : index
      %61 = vector.load %arg8[%c0_33, %c0_34] : memref<1x80xf32, #tpu.memory_space<vmem>>, vector<1x80xf32>
      %62 = vector.broadcast %61 : vector<1x80xf32> to vector<4x80xf32>
      %63 = arith.addf %60, %62 : vector<4x80xf32>
      %64 = vector.extract_strided_slice %63 {offsets = [0, 0], sizes = [4, 64], strides = [1, 1]} : vector<4x80xf32> to vector<4x64xf32>
      %cst_35 = arith.constant 0.353553385 : f32
      %65 = vector.broadcast %cst_35 : f32 to vector<4x64xf32>
      %66 = arith.mulf %64, %65 : vector<4x64xf32>
      %67 = vector.extract_strided_slice %63 {offsets = [0, 64], sizes = [4, 16], strides = [1, 1]} : vector<4x80xf32> to vector<4x16xf32>
      %c0_36 = arith.constant 0 : index
      %c0_37 = arith.constant 0 : index
      %c0_38 = arith.constant 0 : index
      %68 = vector.load %arg3[%c0_36, %c0_37, %c0_38] : memref<1x8x16xf32, #tpu.memory_space<vmem>>, vector<1x8x16xf32>
      %69 = vector.shape_cast %68 : vector<1x8x16xf32> to vector<8x16xf32>
      %c0_39 = arith.constant 0 : index
      %c0_40 = arith.constant 0 : index
      %c0_41 = arith.constant 0 : index
      %70 = vector.load %arg18[%c0_39, %c0_40, %c0_41] : memref<1x12x16xf32, #tpu.memory_space<vmem>>, vector<1x8x16xf32>
      %71 = vector.shape_cast %70 : vector<1x8x16xf32> to vector<8x16xf32>
      %72 = vector.shape_cast %69 : vector<8x16xf32> to vector<1x8x16xf32>
      tpu.vector_store %arg18[%c0_39, %c0_40, %c0_41], %72 {strides = array<i32>} : memref<1x12x16xf32, #tpu.memory_space<vmem>>, vector<1x8x16xf32>,
      %c0_42 = arith.constant 0 : index
      %c8 = arith.constant 8 : index
      %c0_43 = arith.constant 0 : index
      %73 = vector.load %arg18[%c0_42, %c8, %c0_43] : memref<1x12x16xf32, #tpu.memory_space<vmem>>, vector<1x4x16xf32>
      %74 = vector.shape_cast %73 : vector<1x4x16xf32> to vector<4x16xf32>
      %75 = vector.shape_cast %67 : vector<4x16xf32> to vector<1x4x16xf32>
      tpu.vector_store %arg18[%c0_42, %c8, %c0_43], %75 {strides = array<i32>} : memref<1x12x16xf32, #tpu.memory_space<vmem>>, vector<1x4x16xf32>,
      %c0_44 = arith.constant 0 : index
      %c0_45 = arith.constant 0 : index
      %c0_46 = arith.constant 0 : index
      %76 = vector.load %arg18[%c0_44, %c0_45, %c0_46] : memref<1x12x16xf32, #tpu.memory_space<vmem>>, vector<1x12x16xf32>
      %77 = vector.shape_cast %76 : vector<1x12x16xf32> to vector<12x16xf32>
      %78 = vector.extract_strided_slice %77 {offsets = [0, 0], sizes = [12, 8], strides = [1, 1]} : vector<12x16xf32> to vector<12x8xf32>
      %79 = vector.extract_strided_slice %77 {offsets = [0, 8], sizes = [12, 8], strides = [1, 1]} : vector<12x16xf32> to vector<12x8xf32>
      %80 = vector.extract_strided_slice %66 {offsets = [0, 0], sizes = [4, 8], strides = [1, 1]} : vector<4x64xf32> to vector<4x8xf32>
      %81 = vector.extract_strided_slice %66 {offsets = [0, 8], sizes = [4, 8], strides = [1, 1]} : vector<4x64xf32> to vector<4x8xf32>
      %82 = vector.extract_strided_slice %66 {offsets = [0, 16], sizes = [4, 8], strides = [1, 1]} : vector<4x64xf32> to vector<4x8xf32>
      %83 = vector.extract_strided_slice %66 {offsets = [0, 24], sizes = [4, 8], strides = [1, 1]} : vector<4x64xf32> to vector<4x8xf32>
      %84 = vector.extract_strided_slice %66 {offsets = [0, 32], sizes = [4, 8], strides = [1, 1]} : vector<4x64xf32> to vector<4x8xf32>
      %85 = vector.extract_strided_slice %66 {offsets = [0, 40], sizes = [4, 8], strides = [1, 1]} : vector<4x64xf32> to vector<4x8xf32>
      %86 = vector.extract_strided_slice %66 {offsets = [0, 48], sizes = [4, 8], strides = [1, 1]} : vector<4x64xf32> to vector<4x8xf32>
      %87 = vector.extract_strided_slice %66 {offsets = [0, 56], sizes = [4, 8], strides = [1, 1]} : vector<4x64xf32> to vector<4x8xf32>
      %88 = tpu.concatenate %80, %81, %82, %83, %84, %85, %86, %87 in 0 : vector<4x8xf32>, vector<4x8xf32>, vector<4x8xf32>, vector<4x8xf32>, vector<4x8xf32>, vector<4x8xf32>, vector<4x8xf32>, vector<4x8xf32> -> vector<32x8xf32>
      %89 = arith.truncf %88 : vector<32x8xf32> to vector<32x8xbf16>
      %90 = tpu.transpose %78, [1, 0] : vector<12x8xf32> -> vector<8x12xf32>
      %91 = arith.truncf %90 : vector<8x12xf32> to vector<8x12xbf16>
      %cst_47 = arith.constant dense<0.000000e+00> : vector<32x12xf32>
      %92 = tpu.matmul %89, %91, %cst_47 {dimension_numbers = #tpu.dot_dimension_numbers<[1], [0], [0], [1], [0, 0, 1, 1], [], []>} : vector<32x8xbf16>, vector<8x12xbf16>, vector<32x12xf32> -> vector<32x12xf32>
      %c0_48 = arith.constant 0 : index
      %c0_49 = arith.constant 0 : index
      %c0_50 = arith.constant 0 : index
      %c0_51 = arith.constant 0 : index
      %93 = vector.load %arg4[%c0_48, %c0_49, %c0_50, %c0_51] : memref<1x1x4x12xf32, #tpu.memory_space<vmem>>, vector<1x1x4x12xf32>
      %94 = vector.shape_cast %93 : vector<1x1x4x12xf32> to vector<4x12xf32>
      %95 = tpu.concatenate %94, %94, %94, %94, %94, %94, %94, %94 in 0 : vector<4x12xf32>, vector<4x12xf32>, vector<4x12xf32>, vector<4x12xf32>, vector<4x12xf32>, vector<4x12xf32>, vector<4x12xf32>, vector<4x12xf32> -> vector<32x12xf32>
      %cst_52 = arith.constant 0.000000e+00 : f32
      %96 = vector.broadcast %cst_52 : f32 to vector<32x12xf32>
      %97 = arith.cmpf ogt, %95, %96 : vector<32x12xf32>
      %cst_53 = arith.constant -3.40282347E+38 : f32
      %98 = vector.broadcast %cst_53 : f32 to vector<32x12xf32>
      %99 = arith.select %97, %92, %98 : vector<32x12xi1>, vector<32x12xf32>
      %cst_54 = arith.constant dense<0xFF800000> : vector<32xf32>
      %100 = vector.multi_reduction <maximumf>, %99, %cst_54 [1] : vector<32x12xf32> to vector<32xf32>
      %101 = vector.shape_cast %100 : vector<32xf32> to vector<32x1xf32>
      %102 = vector.broadcast %101 : vector<32x1xf32> to vector<32x12xf32>
      %103 = arith.subf %99, %102 : vector<32x12xf32>
      %104 = math.exp %103 : vector<32x12xf32>
      %cst_55 = arith.constant dense<0.000000e+00> : vector<32xf32>
      %105 = vector.multi_reduction <add>, %104, %cst_55 [1] : vector<32x12xf32> to vector<32xf32>
      %106 = vector.shape_cast %105 : vector<32xf32> to vector<32x1xf32>
      %107 = tpu.reciprocal %106 {approx = true} : vector<32x1xf32> -> vector<32x1xf32>
      %108 = vector.broadcast %107 : vector<32x1xf32> to vector<32x12xf32>
      %109 = arith.mulf %104, %108 : vector<32x12xf32>
      %110 = arith.truncf %109 : vector<32x12xf32> to vector<32x12xbf16>
      %111 = arith.truncf %79 : vector<12x8xf32> to vector<12x8xbf16>
      %cst_56 = arith.constant dense<0.000000e+00> : vector<32x8xf32>
      %112 = tpu.matmul %110, %111, %cst_56 {dimension_numbers = #tpu.dot_dimension_numbers<[1], [0], [0], [1], [0, 0, 1, 1], [], []>} : vector<32x12xbf16>, vector<12x8xbf16>, vector<32x8xf32> -> vector<32x8xf32>
      %113 = vector.extract_strided_slice %112 {offsets = [0, 0], sizes = [4, 8], strides = [1, 1]} : vector<32x8xf32> to vector<4x8xf32>
      %114 = vector.extract_strided_slice %112 {offsets = [4, 0], sizes = [4, 8], strides = [1, 1]} : vector<32x8xf32> to vector<4x8xf32>
      %115 = vector.extract_strided_slice %112 {offsets = [8, 0], sizes = [4, 8], strides = [1, 1]} : vector<32x8xf32> to vector<4x8xf32>
      %116 = vector.extract_strided_slice %112 {offsets = [12, 0], sizes = [4, 8], strides = [1, 1]} : vector<32x8xf32> to vector<4x8xf32>
      %117 = vector.extract_strided_slice %112 {offsets = [16, 0], sizes = [4, 8], strides = [1, 1]} : vector<32x8xf32> to vector<4x8xf32>
      %118 = vector.extract_strided_slice %112 {offsets = [20, 0], sizes = [4, 8], strides = [1, 1]} : vector<32x8xf32> to vector<4x8xf32>
      %119 = vector.extract_strided_slice %112 {offsets = [24, 0], sizes = [4, 8], strides = [1, 1]} : vector<32x8xf32> to vector<4x8xf32>
      %120 = vector.extract_strided_slice %112 {offsets = [28, 0], sizes = [4, 8], strides = [1, 1]} : vector<32x8xf32> to vector<4x8xf32>
      %121 = tpu.concatenate %113, %114, %115, %116, %117, %118, %119, %120 in 1 : vector<4x8xf32>, vector<4x8xf32>, vector<4x8xf32>, vector<4x8xf32>, vector<4x8xf32>, vector<4x8xf32>, vector<4x8xf32>, vector<4x8xf32> -> vector<4x64xf32>
      %122 = arith.truncf %121 : vector<4x64xf32> to vector<4x64xbf16>
      %c0_57 = arith.constant 0 : index
      %c0_58 = arith.constant 0 : index
      %123 = vector.load %arg9[%c0_57, %c0_58] : memref<64x64xbf16, #tpu.memory_space<vmem>>, vector<64x64xbf16>
      %cst_59 = arith.constant dense<0.000000e+00> : vector<4x64xf32>
      %124 = tpu.matmul %122, %123, %cst_59 {dimension_numbers = #tpu.dot_dimension_numbers<[1], [0], [0], [1], [0, 0, 1, 1], [], []>} : vector<4x64xbf16>, vector<64x64xbf16>, vector<4x64xf32> -> vector<4x64xf32>
      %c0_60 = arith.constant 0 : index
      %c0_61 = arith.constant 0 : index
      %125 = vector.load %arg10[%c0_60, %c0_61] : memref<1x64xf32, #tpu.memory_space<vmem>>, vector<1x64xf32>
      %126 = vector.broadcast %125 : vector<1x64xf32> to vector<4x64xf32>
      %127 = arith.addf %124, %126 : vector<4x64xf32>
      %128 = arith.addf %33, %127 : vector<4x64xf32>
      %c0_62 = arith.constant 0 : index
      %c0_63 = arith.constant 0 : index
      %129 = vector.load %arg19[%c0_62, %c0_63] : memref<4x64xf32, #tpu.memory_space<vmem>>, vector<4x64xf32>
      tpu.vector_store %arg19[%c0_62, %c0_63], %128 {strides = array<i32>} : memref<4x64xf32, #tpu.memory_space<vmem>>, vector<4x64xf32>,
      %c0_64 = arith.constant 0 : index
      %c0_65 = arith.constant 0 : index
      %130 = vector.load %arg11[%c0_64, %c0_65] : memref<1x64xf32, #tpu.memory_space<vmem>>, vector<1x64xf32>
      %c0_66 = arith.constant 0 : index
      %c0_67 = arith.constant 0 : index
      %131 = vector.load %arg12[%c0_66, %c0_67] : memref<1x64xf32, #tpu.memory_space<vmem>>, vector<1x64xf32>
      %cst_68 = arith.constant dense<0.000000e+00> : vector<4xf32>
      %132 = vector.multi_reduction <add>, %128, %cst_68 [1] : vector<4x64xf32> to vector<4xf32>
      %133 = vector.shape_cast %132 : vector<4xf32> to vector<4x1xf32>
      %cst_69 = arith.constant 6.400000e+01 : f32
      %134 = vector.broadcast %cst_69 : f32 to vector<4x1xf32>
      %135 = arith.divf %133, %134 : vector<4x1xf32>
      %136 = arith.mulf %128, %128 : vector<4x64xf32>
      %cst_70 = arith.constant dense<0.000000e+00> : vector<4xf32>
      %137 = vector.multi_reduction <add>, %136, %cst_70 [1] : vector<4x64xf32> to vector<4xf32>
      %138 = vector.shape_cast %137 : vector<4xf32> to vector<4x1xf32>
      %cst_71 = arith.constant 6.400000e+01 : f32
      %139 = vector.broadcast %cst_71 : f32 to vector<4x1xf32>
      %140 = arith.divf %138, %139 : vector<4x1xf32>
      %141 = arith.mulf %135, %135 : vector<4x1xf32>
      %142 = arith.subf %140, %141 : vector<4x1xf32>
      %143 = vector.broadcast %135 : vector<4x1xf32> to vector<4x64xf32>
      %144 = arith.subf %128, %143 : vector<4x64xf32>
      %cst_72 = arith.constant 9.99999974E-6 : f32
      %145 = vector.broadcast %cst_72 : f32 to vector<4x1xf32>
      %146 = arith.addf %142, %145 : vector<4x1xf32>
      %147 = math.rsqrt %146 : vector<4x1xf32>
      %148 = vector.broadcast %147 : vector<4x1xf32> to vector<4x64xf32>
      %149 = arith.mulf %144, %148 : vector<4x64xf32>
      %150 = vector.broadcast %130 : vector<1x64xf32> to vector<4x64xf32>
      %151 = arith.mulf %149, %150 : vector<4x64xf32>
      %152 = vector.broadcast %131 : vector<1x64xf32> to vector<4x64xf32>
      %153 = arith.addf %151, %152 : vector<4x64xf32>
      %c0_73 = arith.constant 0 : index
      %c0_74 = arith.constant 0 : index
      %154 = vector.load %arg20[%c0_73, %c0_74] : memref<4x64xf32, #tpu.memory_space<vmem>>, vector<4x64xf32>
      tpu.vector_store %arg20[%c0_73, %c0_74], %153 {strides = array<i32>} : memref<4x64xf32, #tpu.memory_space<vmem>>, vector<4x64xf32>,
      %cst_75 = arith.constant 0.000000e+00 : f32
      %155 = vector.broadcast %cst_75 : f32 to vector<4x64xf32>
      %c0_76 = arith.constant 0 : index
      %c0_77 = arith.constant 0 : index
      %156 = vector.load %arg21[%c0_76, %c0_77] : memref<4x64xf32, #tpu.memory_space<vmem>>, vector<4x64xf32>
      tpu.vector_store %arg21[%c0_76, %c0_77], %155 {strides = array<i32>} : memref<4x64xf32, #tpu.memory_space<vmem>>, vector<4x64xf32>,
    } else {
    }
    %c0 = arith.constant 0 : index
    %c0_1 = arith.constant 0 : index
    %3 = vector.load %arg20[%c0, %c0_1] : memref<4x64xf32, #tpu.memory_space<vmem>>, vector<4x64xf32>
    %4 = arith.truncf %3 : vector<4x64xf32> to vector<4x64xbf16>
    %c0_2 = arith.constant 0 : index
    %c0_3 = arith.constant 0 : index
    %5 = vector.load %arg13[%c0_2, %c0_3] : memref<64x128xbf16, #tpu.memory_space<vmem>>, vector<64x128xbf16>
    %cst = arith.constant dense<0.000000e+00> : vector<4x128xf32>
    %6 = tpu.matmul %4, %5, %cst {dimension_numbers = #tpu.dot_dimension_numbers<[1], [0], [0], [1], [0, 0, 1, 1], [], []>} : vector<4x64xbf16>, vector<64x128xbf16>, vector<4x128xf32> -> vector<4x128xf32>
    %c0_4 = arith.constant 0 : index
    %c0_5 = arith.constant 0 : index
    %7 = vector.load %arg14[%c0_4, %c0_5] : memref<1x128xf32, #tpu.memory_space<vmem>>, vector<1x128xf32>
    %8 = vector.broadcast %7 : vector<1x128xf32> to vector<4x128xf32>
    %9 = arith.addf %6, %8 : vector<4x128xf32>
    %10 = arith.mulf %9, %9 : vector<4x128xf32>
    %11 = arith.mulf %9, %10 : vector<4x128xf32>
    %cst_6 = arith.constant 4.471500e-02 : f32
    %12 = vector.broadcast %cst_6 : f32 to vector<4x128xf32>
    %13 = arith.mulf %12, %11 : vector<4x128xf32>
    %14 = arith.addf %9, %13 : vector<4x128xf32>
    %cst_7 = arith.constant 0.797884583 : f32
    %15 = vector.broadcast %cst_7 : f32 to vector<4x128xf32>
    %16 = arith.mulf %15, %14 : vector<4x128xf32>
    %17 = math.tanh %16 : vector<4x128xf32>
    %cst_8 = arith.constant 1.000000e+00 : f32
    %18 = vector.broadcast %cst_8 : f32 to vector<4x128xf32>
    %19 = arith.addf %18, %17 : vector<4x128xf32>
    %cst_9 = arith.constant 5.000000e-01 : f32
    %20 = vector.broadcast %cst_9 : f32 to vector<4x128xf32>
    %21 = arith.mulf %20, %19 : vector<4x128xf32>
    %22 = arith.mulf %9, %21 : vector<4x128xf32>
    %c0_10 = arith.constant 0 : index
    %c0_11 = arith.constant 0 : index
    %23 = vector.load %arg21[%c0_10, %c0_11] : memref<4x64xf32, #tpu.memory_space<vmem>>, vector<4x64xf32>
    %24 = arith.truncf %22 : vector<4x128xf32> to vector<4x128xbf16>
    %c0_12 = arith.constant 0 : index
    %c0_13 = arith.constant 0 : index
    %25 = vector.load %arg15[%c0_12, %c0_13] : memref<128x64xbf16, #tpu.memory_space<vmem>>, vector<128x64xbf16>
    %cst_14 = arith.constant dense<0.000000e+00> : vector<4x64xf32>
    %26 = tpu.matmul %24, %25, %cst_14 {dimension_numbers = #tpu.dot_dimension_numbers<[1], [0], [0], [1], [0, 0, 1, 1], [], []>} : vector<4x128xbf16>, vector<128x64xbf16>, vector<4x64xf32> -> vector<4x64xf32>
    %27 = arith.addf %23, %26 : vector<4x64xf32>
    %c0_15 = arith.constant 0 : index
    %c0_16 = arith.constant 0 : index
    %28 = vector.load %arg21[%c0_15, %c0_16] : memref<4x64xf32, #tpu.memory_space<vmem>>, vector<4x64xf32>
    tpu.vector_store %arg21[%c0_15, %c0_16], %27 {strides = array<i32>} : memref<4x64xf32, #tpu.memory_space<vmem>>, vector<4x64xf32>,
    %c1_i32 = arith.constant 1 : i32
    %29 = arith.cmpi eq, %arg1, %c1_i32 : i32
    %30 = arith.extui %29 : i1 to i32
    %c0_i32_17 = arith.constant 0 : i32
    %31 = arith.cmpi ne, %30, %c0_i32_17 : i32
    scf.if %31 {
      %c0_18 = arith.constant 0 : index
      %c0_19 = arith.constant 0 : index
      %32 = vector.load %arg19[%c0_18, %c0_19] : memref<4x64xf32, #tpu.memory_space<vmem>>, vector<4x64xf32>
      %c0_20 = arith.constant 0 : index
      %c0_21 = arith.constant 0 : index
      %33 = vector.load %arg21[%c0_20, %c0_21] : memref<4x64xf32, #tpu.memory_space<vmem>>, vector<4x64xf32>
      %34 = arith.addf %32, %33 : vector<4x64xf32>
      %c0_22 = arith.constant 0 : index
      %c0_23 = arith.constant 0 : index
      %35 = vector.load %arg16[%c0_22, %c0_23] : memref<1x64xf32, #tpu.memory_space<vmem>>, vector<1x64xf32>
      %36 = vector.broadcast %35 : vector<1x64xf32> to vector<4x64xf32>
      %37 = arith.addf %34, %36 : vector<4x64xf32>
      %c0_24 = arith.constant 0 : index
      %c0_25 = arith.constant 0 : index
      %c0_26 = arith.constant 0 : index
      %38 = vector.load %arg17[%c0_24, %c0_25, %c0_26] : memref<1x4x64xf32, #tpu.memory_space<vmem>>, vector<1x4x64xf32>
      %39 = vector.shape_cast %38 : vector<1x4x64xf32> to vector<4x64xf32>
      %40 = vector.shape_cast %37 : vector<4x64xf32> to vector<1x4x64xf32>
      tpu.vector_store %arg17[%c0_24, %c0_25, %c0_26], %40 {strides = array<i32>} : memref<1x4x64xf32, #tpu.memory_space<vmem>>, vector<1x4x64xf32>,
    } else {
    }
    return
  }
  func.func @transform_0(%arg0: i32, %arg1: i32) -> (i32, i32, i32) {
    %c0_i32 = arith.constant 0 : i32
    %c0_i32_0 = arith.constant 0 : i32
    %c0_i32_1 = arith.constant 0 : i32
    return %arg0, %c0_i32, %c0_i32_0 : i32, i32, i32
  }
  func.func @transform_1(%arg0: i32, %arg1: i32) -> (i32, i32, i32) {
    %c0_i32 = arith.constant 0 : i32
    %c0_i32_0 = arith.constant 0 : i32
    %c0_i32_1 = arith.constant 0 : i32
    return %arg0, %c0_i32, %c0_i32_0 : i32, i32, i32
  }
  func.func @transform_2(%arg0: i32, %arg1: i32) -> (i32, i32, i32, i32) {
    %c0_i32 = arith.constant 0 : i32
    %c0_i32_0 = arith.constant 0 : i32
    %c0_i32_1 = arith.constant 0 : i32
    %c0_i32_2 = arith.constant 0 : i32
    return %arg0, %c0_i32, %c0_i32_0, %c0_i32_1 : i32, i32, i32, i32
  }
  func.func @transform_3(%arg0: i32, %arg1: i32) -> (i32, i32) {
    %c0_i32 = arith.constant 0 : i32
    %c0_i32_0 = arith.constant 0 : i32
    %c0_i32_1 = arith.constant 0 : i32
    return %c0_i32, %c0_i32_0 : i32, i32
  }
  func.func @transform_4(%arg0: i32, %arg1: i32) -> (i32, i32) {
    %c0_i32 = arith.constant 0 : i32
    %c0_i32_0 = arith.constant 0 : i32
    %c0_i32_1 = arith.constant 0 : i32
    return %c0_i32, %c0_i32_0 : i32, i32
  }
  func.func @transform_5(%arg0: i32, %arg1: i32) -> (i32, i32) {
    %c0_i32 = arith.constant 0 : i32
    %c0_i32_0 = arith.constant 0 : i32
    %c0_i32_1 = arith.constant 0 : i32
    return %c0_i32, %c0_i32_0 : i32, i32
  }
  func.func @transform_6(%arg0: i32, %arg1: i32) -> (i32, i32) {
    %c0_i32 = arith.constant 0 : i32
    %c0_i32_0 = arith.constant 0 : i32
    %c0_i32_1 = arith.constant 0 : i32
    return %c0_i32, %c0_i32_0 : i32, i32
  }
  func.func @transform_7(%arg0: i32, %arg1: i32) -> (i32, i32) {
    %c0_i32 = arith.constant 0 : i32
    %c0_i32_0 = arith.constant 0 : i32
    %c0_i32_1 = arith.constant 0 : i32
    return %c0_i32, %c0_i32_0 : i32, i32
  }
  func.func @transform_8(%arg0: i32, %arg1: i32) -> (i32, i32) {
    %c0_i32 = arith.constant 0 : i32
    %c0_i32_0 = arith.constant 0 : i32
    %c0_i32_1 = arith.constant 0 : i32
    return %c0_i32, %c0_i32_0 : i32, i32
  }
  func.func @transform_9(%arg0: i32, %arg1: i32) -> (i32, i32) {
    %c0_i32 = arith.constant 0 : i32
    %c0_i32_0 = arith.constant 0 : i32
    %c0_i32_1 = arith.constant 0 : i32
    return %c0_i32, %c0_i32_0 : i32, i32
  }
  func.func @transform_10(%arg0: i32, %arg1: i32) -> (i32, i32) {
    %c0_i32 = arith.constant 0 : i32
    %c0_i32_0 = arith.constant 0 : i32
    %c0_i32_1 = arith.constant 0 : i32
    return %c0_i32, %c0_i32_0 : i32, i32
  }
  func.func @transform_11(%arg0: i32, %arg1: i32) -> (i32, i32) {
    %c0_i32 = arith.constant 0 : i32
    %c0_i32_0 = arith.constant 0 : i32
    return %c0_i32, %arg1 : i32, i32
  }
  func.func @transform_12(%arg0: i32, %arg1: i32) -> (i32, i32) {
    %c0_i32 = arith.constant 0 : i32
    %c0_i32_0 = arith.constant 0 : i32
    return %c0_i32, %arg1 : i32, i32
  }
  func.func @transform_13(%arg0: i32, %arg1: i32) -> (i32, i32) {
    %c0_i32 = arith.constant 0 : i32
    %c0_i32_0 = arith.constant 0 : i32
    return %arg1, %c0_i32 : i32, i32
  }
  func.func @transform_14(%arg0: i32, %arg1: i32) -> (i32, i32) {
    %c0_i32 = arith.constant 0 : i32
    %c0_i32_0 = arith.constant 0 : i32
    %c0_i32_1 = arith.constant 0 : i32
    return %c0_i32, %c0_i32_0 : i32, i32
  }
  func.func @transform_15(%arg0: i32, %arg1: i32) -> (i32, i32, i32) {
    %c0_i32 = arith.constant 0 : i32
    %c0_i32_0 = arith.constant 0 : i32
    %c0_i32_1 = arith.constant 0 : i32
    return %arg0, %c0_i32, %c0_i32_0 : i32, i32, i32
  }
  func.func @transform_16(%arg0: i32, %arg1: i32) -> (i32, i32, i32) {
    %c0_i32 = arith.constant 0 : i32
    %c0_i32_0 = arith.constant 0 : i32
    %c0_i32_1 = arith.constant 0 : i32
    return %arg0, %c0_i32, %c0_i32_0 : i32, i32, i32
  }
}

</mosaic_0001>

<llo_original>
// kernel: tpu_custom_call.1
$region0: #{tpu_custom_call.1}
  #allocation0 [shape = 'u32[]', space=smem, size = 0x4, offset = 0x4, fixed_abs, tag = 'smem constant byte address 0x4 - core index']
  #allocation1 [shape = 'u32[144,128]{1,0:T(1,128)}', space=vmem, size = 0x12000, scoped, tag = 'internal scratch']
  #allocation2 [shape = 'f32[4,64]{1,0:T(4,128)}', space=vmem, size = 0x800, scoped, tag = 'scratch operand']
  #allocation3 [shape = 'f32[4,64]{1,0:T(4,128)}', space=vmem, size = 0x800, scoped, tag = 'scratch operand']
  #allocation4 [shape = 'f32[4,64]{1,0:T(4,128)}', space=vmem, size = 0x800, scoped, tag = 'scratch operand']
  %s0 = inlined_call_operand.hbm [shape: f32[2,4,64], index: 0, kind: input, shape index: {}]
  %s1 = inlined_call_operand.hbm [shape: f32[2,8,16], index: 1, kind: input, shape index: {}]
  %s2 = inlined_call_operand.hbm [shape: f32[2,1,4,12], index: 2, kind: input, shape index: {}]
  %s3 = inlined_call_operand.hbm [shape: f32[1,64], index: 3, kind: input, shape index: {}]
  %s4 = inlined_call_operand.hbm [shape: f32[1,64], index: 4, kind: input, shape index: {}]
  %s5 = inlined_call_operand.hbm [shape: bf16[64,80], index: 5, kind: input, shape index: {}]
  %s6 = inlined_call_operand.hbm [shape: f32[1,80], index: 6, kind: input, shape index: {}]
  %s7 = inlined_call_operand.hbm [shape: bf16[64,64], index: 7, kind: input, shape index: {}]
  %s8 = inlined_call_operand.hbm [shape: f32[1,64], index: 8, kind: input, shape index: {}]
  %s9 = inlined_call_operand.hbm [shape: f32[1,64], index: 9, kind: input, shape index: {}]
  %s10 = inlined_call_operand.hbm [shape: f32[1,64], index: 10, kind: input, shape index: {}]
  %s11 = inlined_call_operand.hbm [shape: bf16[64,256], index: 11, kind: input, shape index: {}]
  %s12 = inlined_call_operand.hbm [shape: f32[1,256], index: 12, kind: input, shape index: {}]
  %s13 = inlined_call_operand.hbm [shape: bf16[256,64], index: 13, kind: input, shape index: {}]
  %s14 = inlined_call_operand.hbm [shape: f32[1,64], index: 14, kind: input, shape index: {}]
  %s15 = inlined_call_operand.hbm [shape: f32[2,4,64], index: 15, kind: output, shape index: {0}]
  %s16 = inlined_call_operand.hbm [shape: f32[2,12,16], index: 16, kind: output, shape index: {1}]
  %17 = xla_tuple %s15, %s16
  %s18 = sld [smem:[#allocation0]]
  $region169: #{tpu_custom_call.1} parent=0
    _
  %s20 = ssub.s32 1, %s18
  %s21 = scalar_select 0, %s20, %s18
  $region1: #{tpu_custom_call.1} parent=0
    #allocation5 [shape = 'u8[4096]{0}', space=vmem, size = 0x1000, scoped, tag = 'input window, operand 0']
    #allocation6 [shape = 's32[2]{0}', space=sflag, size = 0x8, scoped, tag = 'scoped memory for tpu_custom_call.1']
    #allocation7 [shape = 's32[2]{0}', space=sflag, size = 0x8, scoped, tag = 'scoped memory for tpu_custom_call.1']
    #allocation8 [shape = 'u8[8192]{0}', space=vmem, size = 0x2000, scoped, tag = 'input window, operand 1']
    #allocation9 [shape = 's32[2]{0}', space=sflag, size = 0x8, scoped, tag = 'scoped memory for tpu_custom_call.1']
    #allocation10 [shape = 'u8[4096]{0}', space=vmem, size = 0x1000, scoped, tag = 'input window, operand 2']
    #allocation11 [shape = 'u8[512]{0}', space=vmem, size = 0x400, scoped, tag = 'input window, operand 3, single buffered']
    #allocation12 [shape = 's32[1]{0}', space=sflag, size = 0x4, scoped, tag = 'scoped memory for tpu_custom_call.1']
    #allocation13 [shape = 'u8[512]{0}', space=vmem, size = 0x400, scoped, tag = 'input window, operand 4, single buffered']
    #allocation14 [shape = 'u8[16384]{0}', space=vmem, size = 0x4000, scoped, tag = 'input window, operand 5, single buffered']
    #allocation15 [shape = 's32[1]{0}', space=sflag, size = 0x4, scoped, tag = 'scoped memory for tpu_custom_call.1']
    #allocation16 [shape = 'u8[512]{0}', space=vmem, size = 0x400, scoped, tag = 'input window, operand 6, single buffered']
    #allocation17 [shape = 'u8[16384]{0}', space=vmem, size = 0x4000, scoped, tag = 'input window, operand 7, single buffered']
    #allocation18 [shape = 's32[1]{0}', space=sflag, size = 0x4, scoped, tag = 'scoped memory for tpu_custom_call.1']
    #allocation19 [shape = 'u8[512]{0}', space=vmem, size = 0x400, scoped, tag = 'input window, operand 8, single buffered']
    #allocation20 [shape = 'u8[512]{0}', space=vmem, size = 0x400, scoped, tag = 'input window, operand 9, single buffered']
    #allocation21 [shape = 's32[1]{0}', space=sflag, size = 0x4, scoped, tag = 'scoped memory for tpu_custom_call.1']
    #allocation22 [shape = 'u8[512]{0}', space=vmem, size = 0x400, scoped, tag = 'input window, operand 10, single buffered']
    #allocation23 [shape = 'u8[32768]{0}', space=vmem, size = 0x8000, scoped, tag = 'input window, operand 11']
    #allocation24 [shape = 's32[2]{0}', space=sflag, size = 0x8, scoped, tag = 'scoped memory for tpu_custom_call.1']
    #allocation25 [shape = 'u8[1024]{0}', space=vmem, size = 0x400, scoped, tag = 'input window, operand 12']
    #allocation26 [shape = 'u8[65536]{0}', space=vmem, size = 0x10000, scoped, tag = 'input window, operand 13']
    #allocation27 [shape = 's32[2]{0}', space=sflag, size = 0x8, scoped, tag = 'scoped memory for tpu_custom_call.1']
    #allocation28 [shape = 'u8[512]{0}', space=vmem, size = 0x400, scoped, tag = 'input window, operand 14, single buffered']
    #allocation29 [shape = 'u8[4096]{0}', space=vmem, size = 0x1000, scoped, tag = 'output window, operand 0']
    #allocation30 [shape = 'u8[16384]{0}', space=vmem, size = 0x4000, scoped, tag = 'output window, operand 1']
    #allocation31 [shape = 's32[2]{0}', space=sflag, size = 0x8, scoped, tag = 'scoped memory for tpu_custom_call.1']
    %22 = vsyncpa [#allocation6], 0
    %s23 = scalar_lea.sflag [#allocation6], 1
    %24 = vsyncpa %s23, 0
    %25 = vsyncpa [#allocation9], 0
    %s26 = scalar_lea.sflag [#allocation9], 1
    %27 = vsyncpa %s26, 0
    %28 = vsyncpa [#allocation12], 0
    %29 = vsyncpa [#allocation15], 0
    %30 = vsyncpa [#allocation18], 0
    %31 = vsyncpa [#allocation21], 0
    %32 = vsyncpa [#allocation24], 0
    %s33 = scalar_lea.sflag [#allocation24], 1
    %34 = vsyncpa %s33, 0
    %35 = vsyncpa [#allocation27], 0
    %s36 = scalar_lea.sflag [#allocation27], 1
    %37 = vsyncpa %s36, 0
    %38 = vsyncpa [#allocation7], 0
    %s39 = scalar_lea.sflag [#allocation7], 1
    %40 = vsyncpa %s39, 0
    %41 = vsyncpa [#allocation31], 0
    %s42 = scalar_lea.sflag [#allocation31], 1
    %43 = vsyncpa %s42, 0
    loop: start=0, step=1, limit=6
    $region2: #{tpu_custom_call.1} parent=1 // loop_pre_header
      _
    $region3: #{tpu_custom_call.1} parent=1 // loop_header
      %s45 = sphi 0, %s49
      %p46 = scmp.ge.s32.totalorder %s45, 6
      %s52 = sphi 0, %s64
      %s53 = sphi 0, %s60
      %s54 = sphi 0, %s52
      %s55 = sphi 0, %s53
      %s56 = sphi 0, %s54
      %s57 = sphi 0, %s55
      %s67 = sphi 0, %s69
      %s70 = sphi 0, %s67
      %s71 = sphi 0, %s70
      %s87 = sphi 0, %s71
      %s93 = sphi 0, %s95
      %s96 = sphi 0, %s93
      %s97 = sphi 0, %s96
      %s113 = sphi 0, %s97
      %s119 = sphi 0, %s121
      %s122 = sphi 0, %s119
      %s123 = sphi 0, %s122
      %s139 = sphi 0, %s123
      %s143 = sphi 0, %s143
      %s145 = sphi 0, %s143
      %s146 = sphi 0, %s145
      %s160 = sphi 0, %s146
      %s164 = sphi 0, %s164
      %s166 = sphi 0, %s164
      %s167 = sphi 0, %s166
      %s181 = sphi 0, %s167
      %s185 = sphi 0, %s185
      %s187 = sphi 0, %s185
      %s188 = sphi 0, %s187
      %s202 = sphi 0, %s188
      %s206 = sphi 0, %s206
      %s208 = sphi 0, %s206
      %s209 = sphi 0, %s208
      %s223 = sphi 0, %s209
      %s227 = sphi 0, %s227
      %s229 = sphi 0, %s227
      %s230 = sphi 0, %s229
      %s244 = sphi 0, %s230
      %s248 = sphi 0, %s248
      %s250 = sphi 0, %s248
      %s251 = sphi 0, %s250
      %s265 = sphi 0, %s251
      %s269 = sphi 0, %s269
      %s271 = sphi 0, %s269
      %s272 = sphi 0, %s271
      %s286 = sphi 0, %s272
      %s290 = sphi 0, %s290
      %s292 = sphi 0, %s290
      %s293 = sphi 0, %s292
      %s307 = sphi 0, %s293
      %s313 = sphi 0, %s315
      %s316 = sphi 0, %s313
      %s317 = sphi 0, %s316
      %s333 = sphi 0, %s317
      %s339 = sphi 0, %s341
      %s342 = sphi 0, %s339
      %s343 = sphi 0, %s342
      %s359 = sphi 0, %s343
      %s365 = sphi 0, %s367
      %s368 = sphi 0, %s365
      %s369 = sphi 0, %s368
      %s385 = sphi 0, %s369
      %s389 = sphi 0, %s389
      %s391 = sphi 0, %s389
      %s392 = sphi 0, %s391
      %s406 = sphi 0, %s392
      %s412 = sphi 0, %s414
      %s415 = sphi 0, %s412
      %s416 = sphi 0, %s415
      %s432 = sphi 0, %s416
      %s438 = sphi 0, %s440
      %s441 = sphi 0, %s438
      %s442 = sphi 0, %s441
      %s458 = sphi 0, %s442
    $region4: #{tpu_custom_call.1} parent=1 // loop_header_branch
      %48 = sbr.rel (%p46) target = $region8
    $region5: #{tpu_custom_call.1} parent=1 // loop_body
      %s50 = ssub.s32 %s45, 1
      %s51 = ssub.s32 %s45, 2
      %s58 = sadd.s32 1, %s53
      %p59 = scmp.ge.s32.totalorder %s58, 2
      %s60 = scalar_select %p59, 0, %s58
      %s61 = sadd.s32 1, %s52
      %s62 = scalar_select %p59, %s61, %s52
      %p63 = scmp.ge.s32.totalorder %s62, 2
      %s64 = scalar_select %p63, 0, %s62
      %s65 = ssub.s32 %s52, %s64
      %p66 = scmp.eq.s32.totalorder %s65, 0
      %s68 = sadd.s32 %s67, 1
      %s69 = scalar_select %p66, %s67, %s68
      %p72 = pneg %p66
      %p73 = scmp.eq.s32.totalorder %s45, 3
      %p74 = por %p72, %p73
      %p75 = scmp.ne.s32.totalorder %s67, %s70
      %p76 = scmp.eq.s32.totalorder %s45, 0
      %p77 = por %p75, %p76
      %p78 = scmp.ne.s32.totalorder %s67, %s70
      %p79 = scmp.eq.s32.totalorder %s50, 3
      %p80 = por %p78, %p79
      %p81 = scmp.ne.s32.totalorder %s70, %s71
      %p82 = scmp.eq.s32.totalorder %s50, 0
      %p83 = por %p81, %p82
      %p84 = scmp.ne.s32.totalorder %s70, %s71
      %p85 = scmp.eq.s32.totalorder %s51, 3
      %p86 = por %p84, %p85
      %p88 = scmp.ne.s32.totalorder %s71, %s87
      %p89 = scmp.eq.s32.totalorder %s51, 0
      %p90 = por %p88, %p89
      %s91 = ssub.s32 %s52, %s64
      %p92 = scmp.eq.s32.totalorder %s91, 0
      %s94 = sadd.s32 %s93, 1
      %s95 = scalar_select %p92, %s93, %s94
      %p98 = pneg %p92
      %p99 = scmp.eq.s32.totalorder %s45, 3
      %p100 = por %p98, %p99
      %p101 = scmp.ne.s32.totalorder %s93, %s96
      %p102 = scmp.eq.s32.totalorder %s45, 0
      %p103 = por %p101, %p102
      %p104 = scmp.ne.s32.totalorder %s93, %s96
      %p105 = scmp.eq.s32.totalorder %s50, 3
      %p106 = por %p104, %p105
      %p107 = scmp.ne.s32.totalorder %s96, %s97
      %p108 = scmp.eq.s32.totalorder %s50, 0
      %p109 = por %p107, %p108
      %p110 = scmp.ne.s32.totalorder %s96, %s97
      %p111 = scmp.eq.s32.totalorder %s51, 3
      %p112 = por %p110, %p111
      %p114 = scmp.ne.s32.totalorder %s97, %s113
      %p115 = scmp.eq.s32.totalorder %s51, 0
      %p116 = por %p114, %p115
      %s117 = ssub.s32 %s52, %s64
      %p118 = scmp.eq.s32.totalorder %s117, 0
      %s120 = sadd.s32 %s119, 1
      %s121 = scalar_select %p118, %s119, %s120
      %p124 = pneg %p118
      %p125 = scmp.eq.s32.totalorder %s45, 3
      %p126 = por %p124, %p125
      %p127 = scmp.ne.s32.totalorder %s119, %s122
      %p128 = scmp.eq.s32.totalorder %s45, 0
      %p129 = por %p127, %p128
      %p130 = scmp.ne.s32.totalorder %s119, %s122
      %p131 = scmp.eq.s32.totalorder %s50, 3
      %p132 = por %p130, %p131
      %p133 = scmp.ne.s32.totalorder %s122, %s123
      %p134 = scmp.eq.s32.totalorder %s50, 0
      %p135 = por %p133, %p134
      %p136 = scmp.ne.s32.totalorder %s122, %s123
      %p137 = scmp.eq.s32.totalorder %s51, 3
      %p138 = por %p136, %p137
      %p140 = scmp.ne.s32.totalorder %s123, %s139
      %p141 = scmp.eq.s32.totalorder %s51, 0
      %p142 = por %p140, %p141
      %s144 = sadd.s32 %s143, 1
      %p147 = scmp.eq.s32.totalorder %s45, 3
      %p148 = scmp.ne.s32.totalorder %s143, %s145
      %p149 = scmp.eq.s32.totalorder %s45, 0
      %p150 = por %p148, %p149
      %p151 = scmp.ne.s32.totalorder %s143, %s145
      %p152 = scmp.eq.s32.totalorder %s50, 3
      %p153 = por %p151, %p152
      %p154 = scmp.ne.s32.totalorder %s145, %s146
      %p155 = scmp.eq.s32.totalorder %s50, 0
      %p156 = por %p154, %p155
      %p157 = scmp.ne.s32.totalorder %s145, %s146
      %p158 = scmp.eq.s32.totalorder %s51, 3
      %p159 = por %p157, %p158
      %p161 = scmp.ne.s32.totalorder %s146, %s160
      %p162 = scmp.eq.s32.totalorder %s51, 0
      %p163 = por %p161, %p162
      %s165 = sadd.s32 %s164, 1
      %p168 = scmp.eq.s32.totalorder %s45, 3
      %p169 = scmp.ne.s32.totalorder %s164, %s166
      %p170 = scmp.eq.s32.totalorder %s45, 0
      %p171 = por %p169, %p170
      %p172 = scmp.ne.s32.totalorder %s164, %s166
      %p173 = scmp.eq.s32.totalorder %s50, 3
      %p174 = por %p172, %p173
      %p175 = scmp.ne.s32.totalorder %s166, %s167
      %p176 = scmp.eq.s32.totalorder %s50, 0
      %p177 = por %p175, %p176
      %p178 = scmp.ne.s32.totalorder %s166, %s167
      %p179 = scmp.eq.s32.totalorder %s51, 3
      %p180 = por %p178, %p179
      %p182 = scmp.ne.s32.totalorder %s167, %s181
      %p183 = scmp.eq.s32.totalorder %s51, 0
      %p184 = por %p182, %p183
      %s186 = sadd.s32 %s185, 1
      %p189 = scmp.eq.s32.totalorder %s45, 3
      %p190 = scmp.ne.s32.totalorder %s185, %s187
      %p191 = scmp.eq.s32.totalorder %s45, 0
      %p192 = por %p190, %p191
      %p193 = scmp.ne.s32.totalorder %s185, %s187
      %p194 = scmp.eq.s32.totalorder %s50, 3
      %p195 = por %p193, %p194
      %p196 = scmp.ne.s32.totalorder %s187, %s188
      %p197 = scmp.eq.s32.totalorder %s50, 0
      %p198 = por %p196, %p197
      %p199 = scmp.ne.s32.totalorder %s187, %s188
      %p200 = scmp.eq.s32.totalorder %s51, 3
      %p201 = por %p199, %p200
      %p203 = scmp.ne.s32.totalorder %s188, %s202
      %p204 = scmp.eq.s32.totalorder %s51, 0
      %p205 = por %p203, %p204
      %s207 = sadd.s32 %s206, 1
      %p210 = scmp.eq.s32.totalorder %s45, 3
      %p211 = scmp.ne.s32.totalorder %s206, %s208
      %p212 = scmp.eq.s32.totalorder %s45, 0
      %p213 = por %p211, %p212
      %p214 = scmp.ne.s32.totalorder %s206, %s208
      %p215 = scmp.eq.s32.totalorder %s50, 3
      %p216 = por %p214, %p215
      %p217 = scmp.ne.s32.totalorder %s208, %s209
      %p218 = scmp.eq.s32.totalorder %s50, 0
      %p219 = por %p217, %p218
      %p220 = scmp.ne.s32.totalorder %s208, %s209
      %p221 = scmp.eq.s32.totalorder %s51, 3
      %p222 = por %p220, %p221
      %p224 = scmp.ne.s32.totalorder %s209, %s223
      %p225 = scmp.eq.s32.totalorder %s51, 0
      %p226 = por %p224, %p225
      %s228 = sadd.s32 %s227, 1
      %p231 = scmp.eq.s32.totalorder %s45, 3
      %p232 = scmp.ne.s32.totalorder %s227, %s229
      %p233 = scmp.eq.s32.totalorder %s45, 0
      %p234 = por %p232, %p233
      %p235 = scmp.ne.s32.totalorder %s227, %s229
      %p236 = scmp.eq.s32.totalorder %s50, 3
      %p237 = por %p235, %p236
      %p238 = scmp.ne.s32.totalorder %s229, %s230
      %p239 = scmp.eq.s32.totalorder %s50, 0
      %p240 = por %p238, %p239
      %p241 = scmp.ne.s32.totalorder %s229, %s230
      %p242 = scmp.eq.s32.totalorder %s51, 3
      %p243 = por %p241, %p242
      %p245 = scmp.ne.s32.totalorder %s230, %s244
      %p246 = scmp.eq.s32.totalorder %s51, 0
      %p247 = por %p245, %p246
      %s249 = sadd.s32 %s248, 1
      %p252 = scmp.eq.s32.totalorder %s45, 3
      %p253 = scmp.ne.s32.totalorder %s248, %s250
      %p254 = scmp.eq.s32.totalorder %s45, 0
      %p255 = por %p253, %p254
      %p256 = scmp.ne.s32.totalorder %s248, %s250
      %p257 = scmp.eq.s32.totalorder %s50, 3
      %p258 = por %p256, %p257
      %p259 = scmp.ne.s32.totalorder %s250, %s251
      %p260 = scmp.eq.s32.totalorder %s50, 0
      %p261 = por %p259, %p260
      %p262 = scmp.ne.s32.totalorder %s250, %s251
      %p263 = scmp.eq.s32.totalorder %s51, 3
      %p264 = por %p262, %p263
      %p266 = scmp.ne.s32.totalorder %s251, %s265
      %p267 = scmp.eq.s32.totalorder %s51, 0
      %p268 = por %p266, %p267
      %s270 = sadd.s32 %s269, 1
      %p273 = scmp.eq.s32.totalorder %s45, 3
      %p274 = scmp.ne.s32.totalorder %s269, %s271
      %p275 = scmp.eq.s32.totalorder %s45, 0
      %p276 = por %p274, %p275
      %p277 = scmp.ne.s32.totalorder %s269, %s271
      %p278 = scmp.eq.s32.totalorder %s50, 3
      %p279 = por %p277, %p278
      %p280 = scmp.ne.s32.totalorder %s271, %s272
      %p281 = scmp.eq.s32.totalorder %s50, 0
      %p282 = por %p280, %p281
      %p283 = scmp.ne.s32.totalorder %s271, %s272
      %p284 = scmp.eq.s32.totalorder %s51, 3
      %p285 = por %p283, %p284
      %p287 = scmp.ne.s32.totalorder %s272, %s286
      %p288 = scmp.eq.s32.totalorder %s51, 0
      %p289 = por %p287, %p288
      %s291 = sadd.s32 %s290, 1
      %p294 = scmp.eq.s32.totalorder %s45, 3
      %p295 = scmp.ne.s32.totalorder %s290, %s292
      %p296 = scmp.eq.s32.totalorder %s45, 0
      %p297 = por %p295, %p296
      %p298 = scmp.ne.s32.totalorder %s290, %s292
      %p299 = scmp.eq.s32.totalorder %s50, 3
      %p300 = por %p298, %p299
      %p301 = scmp.ne.s32.totalorder %s292, %s293
      %p302 = scmp.eq.s32.totalorder %s50, 0
      %p303 = por %p301, %p302
      %p304 = scmp.ne.s32.totalorder %s292, %s293
      %p305 = scmp.eq.s32.totalorder %s51, 3
      %p306 = por %p304, %p305
      %p308 = scmp.ne.s32.totalorder %s293, %s307
      %p309 = scmp.eq.s32.totalorder %s51, 0
      %p310 = por %p308, %p309
      %s311 = ssub.s32 %s53, %s60
      %p312 = scmp.eq.s32.totalorder %s311, 0
      %s314 = sadd.s32 %s313, 1
      %s315 = scalar_select %p312, %s313, %s314
      %p318 = pneg %p312
      %p319 = scmp.eq.s32.totalorder %s45, 3
      %p320 = por %p318, %p319
      %p321 = scmp.ne.s32.totalorder %s313, %s316
      %p322 = scmp.eq.s32.totalorder %s45, 0
      %p323 = por %p321, %p322
      %p324 = scmp.ne.s32.totalorder %s313, %s316
      %p325 = scmp.eq.s32.totalorder %s50, 3
      %p326 = por %p324, %p325
      %p327 = scmp.ne.s32.totalorder %s316, %s317
      %p328 = scmp.eq.s32.totalorder %s50, 0
      %p329 = por %p327, %p328
      %p330 = scmp.ne.s32.totalorder %s316, %s317
      %p331 = scmp.eq.s32.totalorder %s51, 3
      %p332 = por %p330, %p331
      %p334 = scmp.ne.s32.totalorder %s317, %s333
      %p335 = scmp.eq.s32.totalorder %s51, 0
      %p336 = por %p334, %p335
      %s337 = ssub.s32 %s53, %s60
      %p338 = scmp.eq.s32.totalorder %s337, 0
      %s340 = sadd.s32 %s339, 1
      %s341 = scalar_select %p338, %s339, %s340
      %p344 = pneg %p338
      %p345 = scmp.eq.s32.totalorder %s45, 3
      %p346 = por %p344, %p345
      %p347 = scmp.ne.s32.totalorder %s339, %s342
      %p348 = scmp.eq.s32.totalorder %s45, 0
      %p349 = por %p347, %p348
      %p350 = scmp.ne.s32.totalorder %s339, %s342
      %p351 = scmp.eq.s32.totalorder %s50, 3
      %p352 = por %p350, %p351
      %p353 = scmp.ne.s32.totalorder %s342, %s343
      %p354 = scmp.eq.s32.totalorder %s50, 0
      %p355 = por %p353, %p354
      %p356 = scmp.ne.s32.totalorder %s342, %s343
      %p357 = scmp.eq.s32.totalorder %s51, 3
      %p358 = por %p356, %p357
      %p360 = scmp.ne.s32.totalorder %s343, %s359
      %p361 = scmp.eq.s32.totalorder %s51, 0
      %p362 = por %p360, %p361
      %s363 = ssub.s32 %s53, %s60
      %p364 = scmp.eq.s32.totalorder %s363, 0
      %s366 = sadd.s32 %s365, 1
      %s367 = scalar_select %p364, %s365, %s366
      %p370 = pneg %p364
      %p371 = scmp.eq.s32.totalorder %s45, 3
      %p372 = por %p370, %p371
      %p373 = scmp.ne.s32.totalorder %s365, %s368
      %p374 = scmp.eq.s32.totalorder %s45, 0
      %p375 = por %p373, %p374
      %p376 = scmp.ne.s32.totalorder %s365, %s368
      %p377 = scmp.eq.s32.totalorder %s50, 3
      %p378 = por %p376, %p377
      %p379 = scmp.ne.s32.totalorder %s368, %s369
      %p380 = scmp.eq.s32.totalorder %s50, 0
      %p381 = por %p379, %p380
      %p382 = scmp.ne.s32.totalorder %s368, %s369
      %p383 = scmp.eq.s32.totalorder %s51, 3
      %p384 = por %p382, %p383
      %p386 = scmp.ne.s32.totalorder %s369, %s385
      %p387 = scmp.eq.s32.totalorder %s51, 0
      %p388 = por %p386, %p387
      %s390 = sadd.s32 %s389, 1
      %p393 = scmp.eq.s32.totalorder %s45, 3
      %p394 = scmp.ne.s32.totalorder %s389, %s391
      %p395 = scmp.eq.s32.totalorder %s45, 0
      %p396 = por %p394, %p395
      %p397 = scmp.ne.s32.totalorder %s389, %s391
      %p398 = scmp.eq.s32.totalorder %s50, 3
      %p399 = por %p397, %p398
      %p400 = scmp.ne.s32.totalorder %s391, %s392
      %p401 = scmp.eq.s32.totalorder %s50, 0
      %p402 = por %p400, %p401
      %p403 = scmp.ne.s32.totalorder %s391, %s392
      %p404 = scmp.eq.s32.totalorder %s51, 3
      %p405 = por %p403, %p404
      %p407 = scmp.ne.s32.totalorder %s392, %s406
      %p408 = scmp.eq.s32.totalorder %s51, 0
      %p409 = por %p407, %p408
      %s410 = ssub.s32 %s52, %s64
      %p411 = scmp.eq.s32.totalorder %s410, 0
      %s413 = sadd.s32 %s412, 1
      %s414 = scalar_select %p411, %s412, %s413
      %p417 = pneg %p411
      %p418 = scmp.eq.s32.totalorder %s45, 3
      %p419 = por %p417, %p418
      %p420 = scmp.ne.s32.totalorder %s412, %s415
      %p421 = scmp.eq.s32.totalorder %s45, 0
      %p422 = por %p420, %p421
      %p423 = scmp.ne.s32.totalorder %s412, %s415
      %p424 = scmp.eq.s32.totalorder %s50, 3
      %p425 = por %p423, %p424
      %p426 = scmp.ne.s32.totalorder %s415, %s416
      %p427 = scmp.eq.s32.totalorder %s50, 0
      %p428 = por %p426, %p427
      %p429 = scmp.ne.s32.totalorder %s415, %s416
      %p430 = scmp.eq.s32.totalorder %s51, 3
      %p431 = por %p429, %p430
      %p433 = scmp.ne.s32.totalorder %s416, %s432
      %p434 = scmp.eq.s32.totalorder %s51, 0
      %p435 = por %p433, %p434
      %s436 = ssub.s32 %s52, %s64
      %p437 = scmp.eq.s32.totalorder %s436, 0
      %s439 = sadd.s32 %s438, 1
      %s440 = scalar_select %p437, %s438, %s439
      %p443 = pneg %p437
      %p444 = scmp.eq.s32.totalorder %s45, 3
      %p445 = por %p443, %p444
      %p446 = scmp.ne.s32.totalorder %s438, %s441
      %p447 = scmp.eq.s32.totalorder %s45, 0
      %p448 = por %p446, %p447
      %p449 = scmp.ne.s32.totalorder %s438, %s441
      %p450 = scmp.eq.s32.totalorder %s50, 3
      %p451 = por %p449, %p450
      %p452 = scmp.ne.s32.totalorder %s441, %s442
      %p453 = scmp.eq.s32.totalorder %s50, 0
      %p454 = por %p452, %p453
      %p455 = scmp.ne.s32.totalorder %s441, %s442
      %p456 = scmp.eq.s32.totalorder %s51, 3
      %p457 = por %p455, %p456
      %p459 = scmp.ne.s32.totalorder %s442, %s458
      %p460 = scmp.eq.s32.totalorder %s51, 0
      %p461 = por %p459, %p460
      %p462 = scmp.le.s32.totalorder 1, %s45
      %p463 = scmp.lt.s32.totalorder %s45, 5
      %p464 = pnand %p462, %p463
      %p465 = pneg %p464
      // Predicated region
      $region9: #{tpu_custom_call.1} parent=5 // pred_check
        _
      $region10: #{tpu_custom_call.1} parent=5 // pred_check_branch
        %467 = sbr.rel (%p464) target = $region12
      $region11: #{tpu_custom_call.1} parent=5 // pred_region
        %s468 = ssub.s32 %s45, 1
        // Predicated region
        $region13: #{tpu_custom_call.1} parent=11 // pred_check
          %p469 = pneg %p156
        $region14: #{tpu_custom_call.1} parent=11 // pred_check_branch
          %471 = sbr.rel (%p469) target = $region16
        $region15: #{tpu_custom_call.1} parent=11 // pred_region
          %s473 = ssub.s32 16, 16
          %474 = vsyncadd [#allocation12], %s473
          %s476 = sshll.u32 [#allocation11], 4
          %s477 = int_to_ptr.vmem [resolvable:$true] %s476
          %479 = dma.hbm_to_vmem [thread:$0]  %s3, 16, %s477, [#allocation12]
        $region16: #{tpu_custom_call.1} parent=11 // pred_fallthru
          _
        // Predicated region
        $region17: #{tpu_custom_call.1} parent=11 // pred_check
          %p480 = pneg %p177
        $region18: #{tpu_custom_call.1} parent=11 // pred_check_branch
          %482 = sbr.rel (%p480) target = $region20
        $region19: #{tpu_custom_call.1} parent=11 // pred_region
          %s484 = ssub.s32 16, 16
          %485 = vsyncadd [#allocation12], %s484
          %s487 = sshll.u32 [#allocation13], 4
          %s488 = int_to_ptr.vmem [resolvable:$true] %s487
          %490 = dma.hbm_to_vmem [thread:$0]  %s4, 16, %s488, [#allocation12]
        $region20: #{tpu_custom_call.1} parent=11 // pred_fallthru
          _
        // Predicated region
        $region21: #{tpu_custom_call.1} parent=11 // pred_check
          %p491 = pneg %p198
        $region22: #{tpu_custom_call.1} parent=11 // pred_check_branch
          %493 = sbr.rel (%p491) target = $region24
        $region23: #{tpu_custom_call.1} parent=11 // pred_region
          %s495 = ssub.s32 512, 512
          %496 = vsyncadd [#allocation15], %s495
          %s497 = sshll.u32 [#allocation14], 4
          %s498 = int_to_ptr.vmem [resolvable:$true] %s497
          %503 = dma.hbm_to_vmem [thread:$0]  %s5, 512, %s498, [#allocation15], 64, 64, 4
        $region24: #{tpu_custom_call.1} parent=11 // pred_fallthru
          _
        // Predicated region
        $region25: #{tpu_custom_call.1} parent=11 // pred_check
          %p504 = pneg %p219
        $region26: #{tpu_custom_call.1} parent=11 // pred_check_branch
          %506 = sbr.rel (%p504) target = $region28
        $region27: #{tpu_custom_call.1} parent=11 // pred_region
          %s508 = ssub.s32 16, 16
          %509 = vsyncadd [#allocation15], %s508
          %s511 = sshll.u32 [#allocation16], 4
          %s512 = int_to_ptr.vmem [resolvable:$true] %s511
          %514 = dma.hbm_to_vmem [thread:$0]  %s6, 16, %s512, [#allocation15]
        $region28: #{tpu_custom_call.1} parent=11 // pred_fallthru
          _
        // Predicated region
        $region29: #{tpu_custom_call.1} parent=11 // pred_check
          %p515 = pneg %p240
        $region30: #{tpu_custom_call.1} parent=11 // pred_check_branch
          %517 = sbr.rel (%p515) target = $region32
        $region31: #{tpu_custom_call.1} parent=11 // pred_region
          %s519 = ssub.s32 512, 512
          %520 = vsyncadd [#allocation18], %s519
          %s521 = sshll.u32 [#allocation17], 4
          %s522 = int_to_ptr.vmem [resolvable:$true] %s521
          %527 = dma.hbm_to_vmem [thread:$0]  %s7, 512, %s522, [#allocation18], 64, 64, 4
        $region32: #{tpu_custom_call.1} parent=11 // pred_fallthru
          _
        // Predicated region
        $region33: #{tpu_custom_call.1} parent=11 // pred_check
          %p528 = pneg %p261
        $region34: #{tpu_custom_call.1} parent=11 // pred_check_branch
          %530 = sbr.rel (%p528) target = $region36
        $region35: #{tpu_custom_call.1} parent=11 // pred_region
          %s532 = ssub.s32 16, 16
          %533 = vsyncadd [#allocation18], %s532
          %s535 = sshll.u32 [#allocation19], 4
          %s536 = int_to_ptr.vmem [resolvable:$true] %s535
          %538 = dma.hbm_to_vmem [thread:$0]  %s8, 16, %s536, [#allocation18]
        $region36: #{tpu_custom_call.1} parent=11 // pred_fallthru
          _
        // Predicated region
        $region37: #{tpu_custom_call.1} parent=11 // pred_check
          %p539 = pneg %p282
        $region38: #{tpu_custom_call.1} parent=11 // pred_check_branch
          %541 = sbr.rel (%p539) target = $region40
        $region39: #{tpu_custom_call.1} parent=11 // pred_region
          %s543 = ssub.s32 16, 16
          %544 = vsyncadd [#allocation21], %s543
          %s546 = sshll.u32 [#allocation20], 4
          %s547 = int_to_ptr.vmem [resolvable:$true] %s546
          %549 = dma.hbm_to_vmem [thread:$0]  %s9, 16, %s547, [#allocation21]
        $region40: #{tpu_custom_call.1} parent=11 // pred_fallthru
          _
        // Predicated region
        $region41: #{tpu_custom_call.1} parent=11 // pred_check
          %p550 = pneg %p303
        $region42: #{tpu_custom_call.1} parent=11 // pred_check_branch
          %552 = sbr.rel (%p550) target = $region44
        $region43: #{tpu_custom_call.1} parent=11 // pred_region
          %s554 = ssub.s32 16, 16
          %555 = vsyncadd [#allocation21], %s554
          %s557 = sshll.u32 [#allocation22], 4
          %s558 = int_to_ptr.vmem [resolvable:$true] %s557
          %560 = dma.hbm_to_vmem [thread:$0]  %s10, 16, %s558, [#allocation21]
        $region44: #{tpu_custom_call.1} parent=11 // pred_fallthru
          _
        // Predicated region
        $region45: #{tpu_custom_call.1} parent=11 // pred_check
          %p561 = pneg %p402
        $region46: #{tpu_custom_call.1} parent=11 // pred_check_branch
          %563 = sbr.rel (%p561) target = $region48
        $region47: #{tpu_custom_call.1} parent=11 // pred_region
          %s565 = ssub.s32 16, 16
          %566 = vsyncadd [#allocation27], %s565
          %s568 = sshll.u32 [#allocation28], 4
          %s569 = int_to_ptr.vmem [resolvable:$true] %s568
          %571 = dma.hbm_to_vmem [thread:$0]  %s14, 16, %s569, [#allocation27]
        $region48: #{tpu_custom_call.1} parent=11 // pred_fallthru
          _
      $region12: #{tpu_custom_call.1} parent=5 // pred_fallthru
        _
      %p572 = scmp.lt.s32.totalorder %s45, 4
      // Predicated region
      $region49: #{tpu_custom_call.1} parent=5 // pred_check
        %p573 = pneg %p572
      $region50: #{tpu_custom_call.1} parent=5 // pred_check_branch
        %575 = sbr.rel (%p573) target = $region52
      $region51: #{tpu_custom_call.1} parent=5 // pred_region
        // Predicated region
        $region53: #{tpu_custom_call.1} parent=51 // pred_check
          %p576 = pneg %p77
        $region54: #{tpu_custom_call.1} parent=51 // pred_check_branch
          %578 = sbr.rel (%p576) target = $region56
        $region55: #{tpu_custom_call.1} parent=51 // pred_region
          %s579 = sand.u32 %s67, 1
          %s580 = scalar_lea.sflag [#allocation6], %s579
          %s581 = sand.u32 %s67, 1
          %s582 = smul.addr %s581, 4
          %s583 = scalar_lea.vmem [#allocation5], %s582
          %s585 = ssub.s32 64, 64
          %586 = vsyncadd %s580, %s585
          %s587 = smul.addr %s52, 64
          %s588 = scalar_lea.hbm %s0, %s587
          %s590 = sshll.u32 %s583, 4
          %s591 = int_to_ptr.vmem [resolvable:$true] %s590
          %593 = dma.hbm_to_vmem [thread:$0]  %s588, 64, %s591, %s580
        $region56: #{tpu_custom_call.1} parent=51 // pred_fallthru
          _
        // Predicated region
        $region57: #{tpu_custom_call.1} parent=51 // pred_check
          %p594 = pneg %p103
        $region58: #{tpu_custom_call.1} parent=51 // pred_check_branch
          %596 = sbr.rel (%p594) target = $region60
        $region59: #{tpu_custom_call.1} parent=51 // pred_region
          %s597 = sand.u32 %s45, 1
          %s598 = scalar_lea.sflag [#allocation9], %s597
          %s599 = sand.u32 %s93, 1
          %s600 = smul.addr %s599, 8
          %s601 = scalar_lea.vmem [#allocation8], %s600
          %s603 = ssub.s32 128, 128
          %604 = vsyncadd %s598, %s603
          %s605 = smul.addr %s52, 128
          %s606 = scalar_lea.hbm %s1, %s605
          %s608 = sshll.u32 %s601, 4
          %s609 = int_to_ptr.vmem [resolvable:$true] %s608
          %611 = dma.hbm_to_vmem [thread:$0]  %s606, 128, %s609, %s598
        $region60: #{tpu_custom_call.1} parent=51 // pred_fallthru
          _
        // Predicated region
        $region61: #{tpu_custom_call.1} parent=51 // pred_check
          %p612 = pneg %p129
        $region62: #{tpu_custom_call.1} parent=51 // pred_check_branch
          %614 = sbr.rel (%p612) target = $region64
        $region63: #{tpu_custom_call.1} parent=51 // pred_region
          %s615 = sand.u32 %s45, 1
          %s616 = scalar_lea.sflag [#allocation9], %s615
          %s617 = sand.u32 %s119, 1
          %s618 = smul.addr %s617, 4
          %s619 = scalar_lea.vmem [#allocation10], %s618
          %s621 = ssub.s32 64, 64
          %622 = vsyncadd %s616, %s621
          %s623 = smul.addr %s52, 64
          %s624 = scalar_lea.hbm %s2, %s623
          %s626 = sshll.u32 %s619, 4
          %s627 = int_to_ptr.vmem [resolvable:$true] %s626
          %629 = dma.hbm_to_vmem [thread:$0]  %s624, 64, %s627, %s616
        $region64: #{tpu_custom_call.1} parent=51 // pred_fallthru
          _
        // Predicated region
        $region65: #{tpu_custom_call.1} parent=51 // pred_check
          %p630 = pneg %p323
        $region66: #{tpu_custom_call.1} parent=51 // pred_check_branch
          %632 = sbr.rel (%p630) target = $region68
        $region67: #{tpu_custom_call.1} parent=51 // pred_region
          %s633 = sand.u32 %s45, 1
          %s634 = scalar_lea.sflag [#allocation24], %s633
          %s635 = sand.u32 %s313, 1
          %s636 = smul.addr %s635, 32
          %s637 = scalar_lea.vmem [#allocation23], %s636
          %s639 = ssub.s32 512, 512
          %640 = vsyncadd %s634, %s639
          %s641 = smul.addr %s53, 64
          %s642 = scalar_lea.hbm %s11, %s641
          %s643 = sshll.u32 %s637, 4
          %s644 = int_to_ptr.vmem [resolvable:$true] %s643
          %649 = dma.hbm_to_vmem [thread:$0]  %s642, 512, %s644, %s634, 128, 64, 4
        $region68: #{tpu_custom_call.1} parent=51 // pred_fallthru
          _
        // Predicated region
        $region69: #{tpu_custom_call.1} parent=51 // pred_check
          %p650 = pneg %p349
        $region70: #{tpu_custom_call.1} parent=51 // pred_check_branch
          %652 = sbr.rel (%p650) target = $region72
        $region71: #{tpu_custom_call.1} parent=51 // pred_region
          %s653 = sand.u32 %s45, 1
          %s654 = scalar_lea.sflag [#allocation24], %s653
          %s655 = sand.u32 %s339, 1
          %s656 = scalar_lea.vmem [#allocation25], %s655
          %s658 = ssub.s32 16, 16
          %659 = vsyncadd %s654, %s658
          %s660 = smul.addr %s53, 16
          %s661 = scalar_lea.hbm %s12, %s660
          %s663 = sshll.u32 %s656, 4
          %s664 = int_to_ptr.vmem [resolvable:$true] %s663
          %666 = dma.hbm_to_vmem [thread:$0]  %s661, 16, %s664, %s654
        $region72: #{tpu_custom_call.1} parent=51 // pred_fallthru
          _
        // Predicated region
        $region73: #{tpu_custom_call.1} parent=51 // pred_check
          %p667 = pneg %p375
        $region74: #{tpu_custom_call.1} parent=51 // pred_check_branch
          %669 = sbr.rel (%p667) target = $region76
        $region75: #{tpu_custom_call.1} parent=51 // pred_region
          %s670 = sand.u32 %s45, 1
          %s671 = scalar_lea.sflag [#allocation27], %s670
          %s672 = sand.u32 %s365, 1
          %s673 = smul.addr %s672, 64
          %s674 = scalar_lea.vmem [#allocation26], %s673
          %s675 = smul.u32 16, %s53
          %s677 = ssub.s32 1024, 1024
          %678 = vsyncadd %s671, %s677
          %s679 = smul.addr %s675, 64
          %s680 = scalar_lea.hbm %s13, %s679
          %s681 = sshll.u32 %s674, 4
          %s682 = int_to_ptr.vmem [resolvable:$true] %s681
          %687 = dma.hbm_to_vmem [thread:$0]  %s680, 1024, %s682, %s671, 64, 64, 4
        $region76: #{tpu_custom_call.1} parent=51 // pred_fallthru
          _
      $region52: #{tpu_custom_call.1} parent=5 // pred_fallthru
        _
      %p688 = scmp.le.s32.totalorder 1, %s45
      %p689 = scmp.lt.s32.totalorder %s45, 5
      %p690 = pnand %p688, %p689
      %p691 = pneg %p690
      // Predicated region
      $region77: #{tpu_custom_call.1} parent=5 // pred_check
        _
      $region78: #{tpu_custom_call.1} parent=5 // pred_check_branch
        %693 = sbr.rel (%p690) target = $region80
      $region79: #{tpu_custom_call.1} parent=5 // pred_region
        %s694 = ssub.s32 %s45, 1
        %s695 = sand.u32 %s70, 1
        %s696 = scalar_lea.sflag [#allocation6], %s695
        %s697 = sand.u32 %s70, 1
        %s698 = smul.addr %s697, 4
        %s699 = scalar_lea.vmem [#allocation5], %s698
        // Predicated region
        $region81: #{tpu_custom_call.1} parent=79 // pred_check
          %p700 = pneg %p83
        $region82: #{tpu_custom_call.1} parent=79 // pred_check_branch
          %702 = sbr.rel (%p700) target = $region84
        $region83: #{tpu_custom_call.1} parent=79 // pred_region
          %703 = dma.done %s696, 64
        $region84: #{tpu_custom_call.1} parent=79 // pred_fallthru
          _
        %s704 = sand.u32 %s50, 1
        %s705 = scalar_lea.sflag [#allocation9], %s704
        %s706 = sand.u32 %s96, 1
        %s707 = smul.addr %s706, 8
        %s708 = scalar_lea.vmem [#allocation8], %s707
        // Predicated region
        $region85: #{tpu_custom_call.1} parent=79 // pred_check
          %p709 = pneg %p109
        $region86: #{tpu_custom_call.1} parent=79 // pred_check_branch
          %711 = sbr.rel (%p709) target = $region88
        $region87: #{tpu_custom_call.1} parent=79 // pred_region
          %712 = dma.done %s705, 128
        $region88: #{tpu_custom_call.1} parent=79 // pred_fallthru
          _
        %s713 = sand.u32 %s50, 1
        %s714 = scalar_lea.sflag [#allocation9], %s713
        %s715 = sand.u32 %s122, 1
        %s716 = smul.addr %s715, 4
        %s717 = scalar_lea.vmem [#allocation10], %s716
        // Predicated region
        $region89: #{tpu_custom_call.1} parent=79 // pred_check
          %p718 = pneg %p135
        $region90: #{tpu_custom_call.1} parent=79 // pred_check_branch
          %720 = sbr.rel (%p718) target = $region92
        $region91: #{tpu_custom_call.1} parent=79 // pred_region
          %721 = dma.done %s714, 64
        $region92: #{tpu_custom_call.1} parent=79 // pred_fallthru
          _
        // Predicated region
        $region93: #{tpu_custom_call.1} parent=79 // pred_check
          %p722 = pneg %p156
        $region94: #{tpu_custom_call.1} parent=79 // pred_check_branch
          %724 = sbr.rel (%p722) target = $region96
        $region95: #{tpu_custom_call.1} parent=79 // pred_region
          %725 = dma.done [#allocation12], 16
        $region96: #{tpu_custom_call.1} parent=79 // pred_fallthru
          _
        // Predicated region
        $region97: #{tpu_custom_call.1} parent=79 // pred_check
          %p726 = pneg %p177
        $region98: #{tpu_custom_call.1} parent=79 // pred_check_branch
          %728 = sbr.rel (%p726) target = $region100
        $region99: #{tpu_custom_call.1} parent=79 // pred_region
          %729 = dma.done [#allocation12], 16
        $region100: #{tpu_custom_call.1} parent=79 // pred_fallthru
          _
        // Predicated region
        $region101: #{tpu_custom_call.1} parent=79 // pred_check
          %p730 = pneg %p198
        $region102: #{tpu_custom_call.1} parent=79 // pred_check_branch
          %732 = sbr.rel (%p730) target = $region104
        $region103: #{tpu_custom_call.1} parent=79 // pred_region
          %733 = dma.done [#allocation15], 512
        $region104: #{tpu_custom_call.1} parent=79 // pred_fallthru
          _
        // Predicated region
        $region105: #{tpu_custom_call.1} parent=79 // pred_check
          %p734 = pneg %p219
        $region106: #{tpu_custom_call.1} parent=79 // pred_check_branch
          %736 = sbr.rel (%p734) target = $region108
        $region107: #{tpu_custom_call.1} parent=79 // pred_region
          %737 = dma.done [#allocation15], 16
        $region108: #{tpu_custom_call.1} parent=79 // pred_fallthru
          _
        // Predicated region
        $region109: #{tpu_custom_call.1} parent=79 // pred_check
          %p738 = pneg %p240
        $region110: #{tpu_custom_call.1} parent=79 // pred_check_branch
          %740 = sbr.rel (%p738) target = $region112
        $region111: #{tpu_custom_call.1} parent=79 // pred_region
          %741 = dma.done [#allocation18], 512
        $region112: #{tpu_custom_call.1} parent=79 // pred_fallthru
          _
        // Predicated region
        $region113: #{tpu_custom_call.1} parent=79 // pred_check
          %p742 = pneg %p261
        $region114: #{tpu_custom_call.1} parent=79 // pred_check_branch
          %744 = sbr.rel (%p742) target = $region116
        $region115: #{tpu_custom_call.1} parent=79 // pred_region
          %745 = dma.done [#allocation18], 16
        $region116: #{tpu_custom_call.1} parent=79 // pred_fallthru
          _
        // Predicated region
        $region117: #{tpu_custom_call.1} parent=79 // pred_check
          %p746 = pneg %p282
        $region118: #{tpu_custom_call.1} parent=79 // pred_check_branch
          %748 = sbr.rel (%p746) target = $region120
        $region119: #{tpu_custom_call.1} parent=79 // pred_region
          %749 = dma.done [#allocation21], 16
        $region120: #{tpu_custom_call.1} parent=79 // pred_fallthru
          _
        // Predicated region
        $region121: #{tpu_custom_call.1} parent=79 // pred_check
          %p750 = pneg %p303
        $region122: #{tpu_custom_call.1} parent=79 // pred_check_branch
          %752 = sbr.rel (%p750) target = $region124
        $region123: #{tpu_custom_call.1} parent=79 // pred_region
          %753 = dma.done [#allocation21], 16
        $region124: #{tpu_custom_call.1} parent=79 // pred_fallthru
          _
        %s754 = sand.u32 %s50, 1
        %s755 = scalar_lea.sflag [#allocation24], %s754
        %s756 = sand.u32 %s316, 1
        %s757 = smul.addr %s756, 32
        %s758 = scalar_lea.vmem [#allocation23], %s757
        // Predicated region
        $region125: #{tpu_custom_call.1} parent=79 // pred_check
          %p759 = pneg %p329
        $region126: #{tpu_custom_call.1} parent=79 // pred_check_branch
          %761 = sbr.rel (%p759) target = $region128
        $region127: #{tpu_custom_call.1} parent=79 // pred_region
          %762 = dma.done %s755, 512
        $region128: #{tpu_custom_call.1} parent=79 // pred_fallthru
          _
        %s763 = sand.u32 %s50, 1
        %s764 = scalar_lea.sflag [#allocation24], %s763
        %s765 = sand.u32 %s342, 1
        %s766 = scalar_lea.vmem [#allocation25], %s765
        // Predicated region
        $region129: #{tpu_custom_call.1} parent=79 // pred_check
          %p767 = pneg %p355
        $region130: #{tpu_custom_call.1} parent=79 // pred_check_branch
          %769 = sbr.rel (%p767) target = $region132
        $region131: #{tpu_custom_call.1} parent=79 // pred_region
          %770 = dma.done %s764, 16
        $region132: #{tpu_custom_call.1} parent=79 // pred_fallthru
          _
        %s771 = sand.u32 %s50, 1
        %s772 = scalar_lea.sflag [#allocation27], %s771
        %s773 = sand.u32 %s368, 1
        %s774 = smul.addr %s773, 64
        %s775 = scalar_lea.vmem [#allocation26], %s774
        // Predicated region
        $region133: #{tpu_custom_call.1} parent=79 // pred_check
          %p776 = pneg %p381
        $region134: #{tpu_custom_call.1} parent=79 // pred_check_branch
          %778 = sbr.rel (%p776) target = $region136
        $region135: #{tpu_custom_call.1} parent=79 // pred_region
          %779 = dma.done %s772, 1024
        $region136: #{tpu_custom_call.1} parent=79 // pred_fallthru
          _
        // Predicated region
        $region137: #{tpu_custom_call.1} parent=79 // pred_check
          %p780 = pneg %p402
        $region138: #{tpu_custom_call.1} parent=79 // pred_check_branch
          %782 = sbr.rel (%p780) target = $region140
        $region139: #{tpu_custom_call.1} parent=79 // pred_region
          %783 = dma.done [#allocation27], 16
        $region140: #{tpu_custom_call.1} parent=79 // pred_fallthru
          _
        %s784 = sand.u32 %s70, 1
        %s785 = scalar_lea.sflag [#allocation6], %s784
        %s786 = sand.u32 %s70, 1
        %s787 = smul.addr %s786, 4
        %s788 = scalar_lea.vmem [#allocation5], %s787
        %p789 = pneg %p83
        %p790 = pneg %p80
        %s791 = sand.u32 %s50, 1
        %s792 = scalar_lea.sflag [#allocation9], %s791
        %s793 = sand.u32 %s96, 1
        %s794 = smul.addr %s793, 8
        %s795 = scalar_lea.vmem [#allocation8], %s794
        %p796 = pneg %p109
        %p797 = pneg %p106
        %s798 = sand.u32 %s50, 1
        %s799 = scalar_lea.sflag [#allocation9], %s798
        %s800 = sand.u32 %s122, 1
        %s801 = smul.addr %s800, 4
        %s802 = scalar_lea.vmem [#allocation10], %s801
        %p803 = pneg %p135
        %p804 = pneg %p132
        %p805 = pneg %p156
        %p806 = pneg %p153
        %p807 = pneg %p177
        %p808 = pneg %p174
        %p809 = pneg %p198
        %p810 = pneg %p195
        %p811 = pneg %p219
        %p812 = pneg %p216
        %p813 = pneg %p240
        %p814 = pneg %p237
        %p815 = pneg %p261
        %p816 = pneg %p258
        %p817 = pneg %p282
        %p818 = pneg %p279
        %p819 = pneg %p303
        %p820 = pneg %p300
        %s821 = sand.u32 %s50, 1
        %s822 = scalar_lea.sflag [#allocation24], %s821
        %s823 = sand.u32 %s316, 1
        %s824 = smul.addr %s823, 32
        %s825 = scalar_lea.vmem [#allocation23], %s824
        %p826 = pneg %p329
        %p827 = pneg %p326
        %s828 = sand.u32 %s50, 1
        %s829 = scalar_lea.sflag [#allocation24], %s828
        %s830 = sand.u32 %s342, 1
        %s831 = scalar_lea.vmem [#allocation25], %s830
        %p832 = pneg %p355
        %p833 = pneg %p352
        %s834 = sand.u32 %s50, 1
        %s835 = scalar_lea.sflag [#allocation27], %s834
        %s836 = sand.u32 %s368, 1
        %s837 = smul.addr %s836, 64
        %s838 = scalar_lea.vmem [#allocation26], %s837
        %p839 = pneg %p381
        %p840 = pneg %p378
        %p841 = pneg %p402
        %p842 = pneg %p399
        %p843 = pneg %p428
        %p844 = pneg %p425
        %s845 = sand.u32 %s415, 1
        %s846 = scalar_lea.sflag [#allocation7], %s845
        %s847 = sand.u32 %s415, 1
        %s848 = smul.addr %s847, 4
        %s849 = scalar_lea.vmem [#allocation29], %s848
        %p850 = pneg %p454
        %p851 = pneg %p451
        %s852 = sand.u32 %s441, 1
        %s853 = scalar_lea.sflag [#allocation31], %s852
        %s854 = sand.u32 %s441, 1
        %s855 = smul.addr %s854, 16
        %s856 = scalar_lea.vmem [#allocation30], %s855
        %s857 = smul.u32 16, %s55
        %p859 = scmp.eq.s32.totalorder %s55, 0
        // Predicated region
        $region141: #{tpu_custom_call.1} parent=79 // pred_check
          %p860 = pneg %p859
        $region142: #{tpu_custom_call.1} parent=79 // pred_check_branch
          %862 = sbr.rel (%p860) target = $region144
        $region143: #{tpu_custom_call.1} parent=79 // pred_region
          %v863 = vld [vmem:[%s699] sm:$0xf]
          %v864 = vld [vmem:[#allocation11] sm:$0x1]
          %v865 = vld [vmem:[#allocation13] sm:$0x1]
          %vm866 = vcmask 519168
          %v867 = vsel %vm866, %v863, 0.0
          %868 = vadd.xlane.f32.xlu0 %v867
          %v869 = vpop.xlane.xlu0 %868
          %v870 = vrcp.pop 64.0
          %v871 = vmul.f32 %v869, %v870
          %v872 = vmul.f32 %v863, %v863
          %v873 = vsel %vm866, %v872, 0.0
          %874 = vadd.xlane.f32.xlu0 %v873
          %v875 = vpop.xlane.xlu0 %874
          %v876 = vmul.f32 %v875, %v870
          %v877 = vmul.f32 %v871, %v871
          %v878 = vsub.f32 %v876, %v877
          %v879 = vsub.f32 %v863, %v871
          %v880 = vadd.f32 %v878, 1e-05
          %v881 = vrsqrt.pop %v880
          %v882 = vmul.f32 %v879, %v881
          %v884 = vlaneseq
          %v885 = vshrl.u32 %v884, 7
          %v886 = vsub.s32 0, %v885
          %v887 = vrot.slane %v864, %v886
          %v889 = vmul.f32 %v882, %v887
          %v891 = vlaneseq
          %v892 = vshrl.u32 %v891, 7
          %v893 = vsub.s32 0, %v892
          %v894 = vrot.slane %v865, %v893
          %v896 = vadd.f32 %v889, %v894
          %v897 = vpack.c.bf16 %v896, %v896
          %v898 = vld [vmem:[#allocation14] sm:$0xf]
          %v899 = vld [vmem:[#allocation14 + $0x4] sm:$0xf]
          %v900 = vld [vmem:[#allocation14 + $0x8] sm:$0xf]
          %v901 = vld [vmem:[#allocation14 + $0xc] sm:$0xf]
          %v902 = vld [vmem:[#allocation14 + $0x10] sm:$0xf]
          %v903 = vld [vmem:[#allocation14 + $0x14] sm:$0xf]
          %v904 = vld [vmem:[#allocation14 + $0x18] sm:$0xf]
          %v905 = vld [vmem:[#allocation14 + $0x1c] sm:$0xf]
          %v906 = vld [vmem:[#allocation16] sm:$0x1]
          %v908 = vlaneseq
          %v909 = vshrl.u32 %v908, 7
          %v910 = vsub.s32 0, %v909
          %v911 = vrot.slane %v906, %v910
          %v921 = vunpack.c.l.b16 %v898
          %v922 = vunpack.c.l.b16 %v899
          %v923 = vunpack.c.l.b16 %v900
          %v924 = vunpack.c.l.b16 %v901
          %v925 = vunpack.c.l.b16 %v902
          %v926 = vunpack.c.l.b16 %v903
          %v927 = vunpack.c.l.b16 %v904
          %v928 = vunpack.c.l.b16 %v905
          %v929 = vpack.c.b16 %v922, %v921
          %v930 = vpack.c.b16 %v924, %v923
          %v931 = vpack.c.b16 %v926, %v925
          %v932 = vpack.c.b16 %v928, %v927
          %vm937 = vcmask 523264
          %v939 = vsel %vm937, %v897, 0
          %941 = vmatprep.subr.bf16.mxu0 0
          %942 = vmatpush1.bf16.msra.mxu0 %v929
          %943 = vmatprep.subr.bf16.mxu0 0
          %944 = vmatpush1.bf16.msra.mxu0 %v930
          %945 = vmatprep.subr.bf16.mxu0 0
          %946 = vmatpush1.bf16.msra.mxu0 %v931
          %947 = vmatprep.subr.bf16.mxu0 0
          %948 = vmatpush1.bf16.msra.mxu0 %v932
          %949 = vmatprep.subr.bf16.mxu0 0
          %950 = vmatpush1.bf16.msra.mxu0 0
          %951 = vmatprep.subr.bf16.mxu0 0
          %952 = vmatpush1.bf16.msra.mxu0 0
          %953 = vmatprep.subr.bf16.mxu0 0
          %954 = vmatpush1.bf16.msra.mxu0 0
          %955 = vmatprep.subr.bf16.mxu0 0
          %956 = vmatpush1.bf16.msra.mxu0 0
          %957 = vmatprep.subr.bf16.mxu0 0
          %958 = vmatpush1.bf16.msra.mxu0 0
          %959 = vmatprep.subr.bf16.mxu0 0
          %960 = vmatpush1.bf16.msra.mxu0 0
          %961 = vmatprep.subr.bf16.mxu0 0
          %962 = vmatpush1.bf16.msra.mxu0 0
          %963 = vmatprep.subr.bf16.mxu0 0
          %964 = vmatpush1.bf16.msra.mxu0 0
          %965 = vmatprep.subr.bf16.mxu0 0
          %966 = vmatpush1.bf16.msra.mxu0 0
          %967 = vmatprep.subr.bf16.mxu0 0
          %968 = vmatpush1.bf16.msra.mxu0 0
          %969 = vmatprep.subr.bf16.mxu0 0
          %970 = vmatpush1.bf16.msra.mxu0 0
          %971 = vmatprep.subr.bf16.mxu0 0
          %972 = vmatpush1.bf16.msra.mxu0 0
          %973 = vmatprep.mubr.bf16.mxu0 0
          %974 = vmatmul.mubr.bf16.gmra.mrb[0].mxu0 %v939
          %v975 = vpop.f32.mrb[0].mxu0
          %v976 = vadd.f32 %v911, %v975
          %v977 = vpop.f32.mrb[0].mxu0
          %v978 = vpop.f32.mrb[0].mxu0
          %v979 = vpop.f32.mrb[0].mxu0
          %980 = vdwg.mxu0
          %v981 = vmul.f32 %v976, 0.35355338
          %v982 = vld [vmem:[%s708] sm:$0xff]
          %vm983 = vcmask 130048
          %984 = vst.msk [vmem:[%s856] sm:$0xff] %vm983, %v982
          %986 = vrot.lane.b32.xlu0 %v976, 64
          %v987 = vpop.permute.xlu0 %986
          %vm989 = vcmask 125952
          %990 = vst.msk [vmem:[%s856 + $0x8] sm:$0xf] %vm989, %v987
          %v991 = vld [vmem:[%s856] sm:$0xff]
          %v992 = vld [vmem:[%s856 + $0x8] sm:$0xf]
          %v994 = vrot.slane %v981, 4
          %995 = vrot.lane.b32.xlu0 %v994, 120
          %v996 = vpop.permute.xlu0 %995
          %998 = vrot.lane.b32.xlu0 %v981, 112
          %v999 = vpop.permute.xlu0 %998
          %1001 = vrot.lane.b32.xlu0 %v994, 104
          %v1002 = vpop.permute.xlu0 %1001
          %1004 = vrot.lane.b32.xlu0 %v981, 96
          %v1005 = vpop.permute.xlu0 %1004
          %1007 = vrot.lane.b32.xlu0 %v994, 88
          %v1008 = vpop.permute.xlu0 %1007
          %1010 = vrot.lane.b32.xlu0 %v981, 80
          %v1011 = vpop.permute.xlu0 %1010
          %1013 = vrot.lane.b32.xlu0 %v994, 72
          %v1014 = vpop.permute.xlu0 %1013
          %vm1016 = vcmask 1043456
          %v1017 = vsel %vm1016, %v981, %v996
          %v1018 = vsel %vm1016, %v999, %v1002
          %v1019 = vsel %vm1016, %v1005, %v1008
          %v1020 = vsel %vm1016, %v1011, %v1014
          %v1021 = vpack.c.bf16 %v1018, %v1017
          %v1022 = vpack.c.bf16 %v1020, %v1019
          %1023 = vxpose.xlu0.b32.start [1/16] %v991, 128
          %1024 = vxpose.xlu0.b32.cont [2/16] %v992, 128
          %1025 = vxpose.xlu0.b32.cont [3/16] 0.0, 128
          %1026 = vxpose.xlu0.b32.cont [4/16] 0.0, 128
          %1027 = vxpose.xlu0.b32.cont [5/16] 0.0, 128
          %1028 = vxpose.xlu0.b32.cont [6/16] 0.0, 128
          %1029 = vxpose.xlu0.b32.cont [7/16] 0.0, 128
          %1030 = vxpose.xlu0.b32.cont [8/16] 0.0, 128
          %1031 = vxpose.xlu0.b32.cont [9/16] 0.0, 128
          %1032 = vxpose.xlu0.b32.cont [10/16] 0.0, 128
          %1033 = vxpose.xlu0.b32.cont [11/16] 0.0, 128
          %1034 = vxpose.xlu0.b32.cont [12/16] 0.0, 128
          %1035 = vxpose.xlu0.b32.cont [13/16] 0.0, 128
          %1036 = vxpose.xlu0.b32.cont [14/16] 0.0, 128
          %1037 = vxpose.xlu0.b32.cont [15/16] 0.0, 128
          %1038 = vxpose.xlu0.b32.end [16/16] 0.0, 128
          %v1039 = vpop.trf.xlu0
          %v1040 = vpop.trf.xlu0
          %v1041 = vpop.trf.xlu0
          %v1042 = vpop.trf.xlu0
          %v1043 = vpop.trf.xlu0
          %v1044 = vpop.trf.xlu0
          %v1045 = vpop.trf.xlu0
          %v1046 = vpop.trf.xlu0
          %v1047 = vpop.trf.xlu0
          %v1048 = vpop.trf.xlu0
          %v1049 = vpop.trf.xlu0
          %v1050 = vpop.trf.xlu0
          %v1051 = vpop.trf.xlu0
          %v1052 = vpop.trf.xlu0
          %v1053 = vpop.trf.xlu0
          %v1054 = vpop.trf.xlu0
          %v1055 = vpack.c.bf16 %v1039, %v1039
          %vm1056 = vcmask 64512
          %v1058 = vsel %vm1056, %v1021, 0
          %v1061 = vsel %vm1056, %v1022, 0
          %v1064 = vsel %vm1016, %v1055, 0
          %1066 = vmatprep.subr.bf16.mxu0 0
          %1067 = vmatpush1.bf16.msra.mxu0 %v1064
          %1068 = vmatprep.subr.bf16.mxu0 0
          %1069 = vmatpush1.bf16.msra.mxu0 0
          %1070 = vmatprep.subr.bf16.mxu0 0
          %1071 = vmatpush1.bf16.msra.mxu0 0
          %1072 = vmatprep.subr.bf16.mxu0 0
          %1073 = vmatpush1.bf16.msra.mxu0 0
          %1074 = vmatprep.subr.bf16.mxu0 0
          %1075 = vmatpush1.bf16.msra.mxu0 0
          %1076 = vmatprep.subr.bf16.mxu0 0
          %1077 = vmatpush1.bf16.msra.mxu0 0
          %1078 = vmatprep.subr.bf16.mxu0 0
          %1079 = vmatpush1.bf16.msra.mxu0 0
          %1080 = vmatprep.subr.bf16.mxu0 0
          %1081 = vmatpush1.bf16.msra.mxu0 0
          %1082 = vmatprep.subr.bf16.mxu0 0
          %1083 = vmatpush1.bf16.msra.mxu0 0
          %1084 = vmatprep.subr.bf16.mxu0 0
          %1085 = vmatpush1.bf16.msra.mxu0 0
          %1086 = vmatprep.subr.bf16.mxu0 0
          %1087 = vmatpush1.bf16.msra.mxu0 0
          %1088 = vmatprep.subr.bf16.mxu0 0
          %1089 = vmatpush1.bf16.msra.mxu0 0
          %1090 = vmatprep.subr.bf16.mxu0 0
          %1091 = vmatpush1.bf16.msra.mxu0 0
          %1092 = vmatprep.subr.bf16.mxu0 0
          %1093 = vmatpush1.bf16.msra.mxu0 0
          %1094 = vmatprep.subr.bf16.mxu0 0
          %1095 = vmatpush1.bf16.msra.mxu0 0
          %1096 = vmatprep.subr.bf16.mxu0 0
          %1097 = vmatpush1.bf16.msra.mxu0 0
          %1098 = vmatprep.mubr.bf16.mxu0 0
          %1099 = vmatmul.mubr.bf16.gmra.mrb[0].mxu0 %v1058
          %v1100 = vpop.f32.mrb[0].mxu0
          %v1101 = vadd.f32 0.0, %v1100
          %v1102 = vpop.f32.mrb[0].mxu0
          %v1103 = vpop.f32.mrb[0].mxu0
          %v1104 = vadd.f32 0.0, %v1103
          %v1105 = vpop.f32.mrb[0].mxu0
          %1106 = vmatprep.mubr.bf16.mxu0 0
          %1107 = vmatmul.mubr.bf16.gmra.mrb[0].mxu0 %v1061
          %v1108 = vpop.f32.mrb[0].mxu0
          %v1109 = vadd.f32 0.0, %v1108
          %v1110 = vpop.f32.mrb[0].mxu0
          %v1111 = vpop.f32.mrb[0].mxu0
          %v1112 = vadd.f32 0.0, %v1111
          %v1113 = vpop.f32.mrb[0].mxu0
          %1114 = vdwg.mxu0
          %v1115 = vld [vmem:[%s717] sm:$0xf]
          %v1117 = vrot.slane %v1115, 4
          %v1119 = vsel %vm1016, %v1115, %v1117
          %vm1120 = vcmp.gt.f32.partialorder %v1119, 0.0
          %v1121 = vsel %vm1120, %v1101, -3.4028235e+38
          %v1122 = vsel %vm1120, %v1104, -3.4028235e+38
          %v1123 = vsel %vm1120, %v1109, -3.4028235e+38
          %v1124 = vsel %vm1120, %v1112, -3.4028235e+38
          %vm1125 = vcmask 97280
          %v1126 = vsel %vm1125, %v1121, -inf
          %1127 = vmax.xlane.f32.xlu0 %v1126
          %v1128 = vpop.xlane.xlu0 %1127
          %v1129 = vsel %vm1125, %v1122, -inf
          %1130 = vmax.xlane.f32.xlu0 %v1129
          %v1131 = vpop.xlane.xlu0 %1130
          %v1132 = vsel %vm1125, %v1123, -inf
          %1133 = vmax.xlane.f32.xlu0 %v1132
          %v1134 = vpop.xlane.xlu0 %1133
          %v1135 = vsel %vm1125, %v1124, -inf
          %1136 = vmax.xlane.f32.xlu0 %v1135
          %v1137 = vpop.xlane.xlu0 %1136
          %v1138 = vsub.f32 %v1121, %v1128
          %v1139 = vsub.f32 %v1122, %v1131
          %v1140 = vsub.f32 %v1123, %v1134
          %v1141 = vsub.f32 %v1124, %v1137
          %v1142 = vmul.f32 %v1138, 1.442695
          %v1143 = vpow.pop %v1142
          %v1144 = vmul.f32 %v1139, 1.442695
          %v1145 = vpow.pop %v1144
          %v1146 = vmul.f32 %v1140, 1.442695
          %v1147 = vpow.pop %v1146
          %v1148 = vmul.f32 %v1141, 1.442695
          %v1149 = vpow.pop %v1148
          %v1150 = vsel %vm1125, %v1143, 0.0
          %1151 = vadd.xlane.f32.xlu0 %v1150
          %v1152 = vpop.xlane.xlu0 %1151
          %v1153 = vsel %vm1125, %v1145, 0.0
          %1154 = vadd.xlane.f32.xlu0 %v1153
          %v1155 = vpop.xlane.xlu0 %1154
          %v1156 = vsel %vm1125, %v1147, 0.0
          %1157 = vadd.xlane.f32.xlu0 %v1156
          %v1158 = vpop.xlane.xlu0 %1157
          %v1159 = vsel %vm1125, %v1149, 0.0
          %1160 = vadd.xlane.f32.xlu0 %v1159
          %v1161 = vpop.xlane.xlu0 %1160
          %v1162 = vrcp.pop %v1152
          %v1163 = vrcp.pop %v1155
          %v1164 = vrcp.pop %v1158
          %v1165 = vrcp.pop %v1161
          %v1166 = vmul.f32 %v1143, %v1162
          %v1167 = vmul.f32 %v1145, %v1163
          %v1168 = vmul.f32 %v1147, %v1164
          %v1169 = vmul.f32 %v1149, %v1165
          %v1170 = vpack.c.bf16 %v1167, %v1166
          %v1171 = vpack.c.bf16 %v1169, %v1168
          %v1172 = vpack.c.bf16 %v992, %v991
          %1174 = vrot.lane.b32.xlu0 %v1172, 120
          %v1175 = vpop.permute.xlu0 %1174
          %v1177 = vsel %vm1125, %v1170, 0
          %v1180 = vsel %vm1125, %v1171, 0
          %vm1182 = vcmask 1045504
          %v1184 = vsel %vm1182, %v1175, 0
          %1186 = vmatprep.subr.bf16.mxu0 0
          %1187 = vmatpush1.bf16.msra.mxu0 %v1184
          %1188 = vmatprep.subr.bf16.mxu0 0
          %1189 = vmatpush1.bf16.msra.mxu0 0
          %1190 = vmatprep.subr.bf16.mxu0 0
          %1191 = vmatpush1.bf16.msra.mxu0 0
          %1192 = vmatprep.subr.bf16.mxu0 0
          %1193 = vmatpush1.bf16.msra.mxu0 0
          %1194 = vmatprep.subr.bf16.mxu0 0
          %1195 = vmatpush1.bf16.msra.mxu0 0
          %1196 = vmatprep.subr.bf16.mxu0 0
          %1197 = vmatpush1.bf16.msra.mxu0 0
          %1198 = vmatprep.subr.bf16.mxu0 0
          %1199 = vmatpush1.bf16.msra.mxu0 0
          %1200 = vmatprep.subr.bf16.mxu0 0
          %1201 = vmatpush1.bf16.msra.mxu0 0
          %1202 = vmatprep.subr.bf16.mxu0 0
          %1203 = vmatpush1.bf16.msra.mxu0 0
          %1204 = vmatprep.subr.bf16.mxu0 0
          %1205 = vmatpush1.bf16.msra.mxu0 0
          %1206 = vmatprep.subr.bf16.mxu0 0
          %1207 = vmatpush1.bf16.msra.mxu0 0
          %1208 = vmatprep.subr.bf16.mxu0 0
          %1209 = vmatpush1.bf16.msra.mxu0 0
          %1210 = vmatprep.subr.bf16.mxu0 0
          %1211 = vmatpush1.bf16.msra.mxu0 0
          %1212 = vmatprep.subr.bf16.mxu0 0
          %1213 = vmatpush1.bf16.msra.mxu0 0
          %1214 = vmatprep.subr.bf16.mxu0 0
          %1215 = vmatpush1.bf16.msra.mxu0 0
          %1216 = vmatprep.subr.bf16.mxu0 0
          %1217 = vmatpush1.bf16.msra.mxu0 0
          %1218 = vmatprep.mubr.bf16.mxu0 0
          %1219 = vmatmul.mubr.bf16.gmra.mrb[0].mxu0 %v1177
          %v1220 = vpop.f32.mrb[0].mxu0
          %v1221 = vadd.f32 0.0, %v1220
          %v1222 = vpop.f32.mrb[0].mxu0
          %v1223 = vpop.f32.mrb[0].mxu0
          %v1224 = vadd.f32 0.0, %v1223
          %v1225 = vpop.f32.mrb[0].mxu0
          %1226 = vmatprep.mubr.bf16.mxu0 0
          %1227 = vmatmul.mubr.bf16.gmra.mrb[0].mxu0 %v1180
          %v1228 = vpop.f32.mrb[0].mxu0
          %v1229 = vadd.f32 0.0, %v1228
          %v1230 = vpop.f32.mrb[0].mxu0
          %v1231 = vpop.f32.mrb[0].mxu0
          %v1232 = vadd.f32 0.0, %v1231
          %v1233 = vpop.f32.mrb[0].mxu0
          %1234 = vdwg.mxu0
          %v1236 = vrot.slane %v1221, 4
          %1237 = vrot.lane.b32.xlu0 %v1236, 8
          %v1238 = vpop.permute.xlu0 %1237
          %1241 = vrot.lane.b32.xlu0 %v1224, 16
          %v1242 = vpop.permute.xlu0 %1241
          %v1244 = vrot.slane %v1224, 4
          %1245 = vrot.lane.b32.xlu0 %v1244, 24
          %v1246 = vpop.permute.xlu0 %1245
          %1249 = vrot.lane.b32.xlu0 %v1229, 32
          %v1250 = vpop.permute.xlu0 %1249
          %v1252 = vrot.slane %v1229, 4
          %1253 = vrot.lane.b32.xlu0 %v1252, 40
          %v1254 = vpop.permute.xlu0 %1253
          %1257 = vrot.lane.b32.xlu0 %v1232, 48
          %v1258 = vpop.permute.xlu0 %1257
          %v1260 = vrot.slane %v1232, 4
          %1261 = vrot.lane.b32.xlu0 %v1260, 56
          %v1262 = vpop.permute.xlu0 %1261
          %v1264 = vsel %vm1056, %v1221, %v1238
          %v1265 = vsel %vm983, %v1264, %v1242
          %vm1266 = vcmask 195584
          %v1267 = vsel %vm1266, %v1265, %v1246
          %vm1268 = vcmask 261120
          %v1269 = vsel %vm1268, %v1267, %v1250
          %vm1270 = vcmask 326656
          %v1271 = vsel %vm1270, %v1269, %v1254
          %vm1272 = vcmask 392192
          %v1273 = vsel %vm1272, %v1271, %v1258
          %vm1274 = vcmask 457728
          %v1275 = vsel %vm1274, %v1273, %v1262
          %v1276 = vpack.c.bf16 %v1275, %v1275
          %v1277 = vld [vmem:[#allocation17] sm:$0xf]
          %v1278 = vld [vmem:[#allocation17 + $0x4] sm:$0xf]
          %v1279 = vld [vmem:[#allocation17 + $0x8] sm:$0xf]
          %v1280 = vld [vmem:[#allocation17 + $0xc] sm:$0xf]
          %v1281 = vld [vmem:[#allocation17 + $0x10] sm:$0xf]
          %v1282 = vld [vmem:[#allocation17 + $0x14] sm:$0xf]
          %v1283 = vld [vmem:[#allocation17 + $0x18] sm:$0xf]
          %v1284 = vld [vmem:[#allocation17 + $0x1c] sm:$0xf]
          %v1285 = vld [vmem:[#allocation19] sm:$0x1]
          %v1287 = vlaneseq
          %v1288 = vshrl.u32 %v1287, 7
          %v1289 = vsub.s32 0, %v1288
          %v1290 = vrot.slane %v1285, %v1289
          %v1300 = vunpack.c.l.b16 %v1277
          %v1301 = vunpack.c.l.b16 %v1278
          %v1302 = vunpack.c.l.b16 %v1279
          %v1303 = vunpack.c.l.b16 %v1280
          %v1304 = vunpack.c.l.b16 %v1281
          %v1305 = vunpack.c.l.b16 %v1282
          %v1306 = vunpack.c.l.b16 %v1283
          %v1307 = vunpack.c.l.b16 %v1284
          %v1308 = vpack.c.b16 %v1301, %v1300
          %v1309 = vpack.c.b16 %v1303, %v1302
          %v1310 = vpack.c.b16 %v1305, %v1304
          %v1311 = vpack.c.b16 %v1307, %v1306
          %v1317 = vsel %vm937, %v1276, 0
          %1319 = vmatprep.subr.bf16.mxu0 0
          %1320 = vmatpush1.bf16.msra.mxu0 %v1308
          %1321 = vmatprep.subr.bf16.mxu0 0
          %1322 = vmatpush1.bf16.msra.mxu0 %v1309
          %1323 = vmatprep.subr.bf16.mxu0 0
          %1324 = vmatpush1.bf16.msra.mxu0 %v1310
          %1325 = vmatprep.subr.bf16.mxu0 0
          %1326 = vmatpush1.bf16.msra.mxu0 %v1311
          %1327 = vmatprep.subr.bf16.mxu0 0
          %1328 = vmatpush1.bf16.msra.mxu0 0
          %1329 = vmatprep.subr.bf16.mxu0 0
          %1330 = vmatpush1.bf16.msra.mxu0 0
          %1331 = vmatprep.subr.bf16.mxu0 0
          %1332 = vmatpush1.bf16.msra.mxu0 0
          %1333 = vmatprep.subr.bf16.mxu0 0
          %1334 = vmatpush1.bf16.msra.mxu0 0
          %1335 = vmatprep.subr.bf16.mxu0 0
          %1336 = vmatpush1.bf16.msra.mxu0 0
          %1337 = vmatprep.subr.bf16.mxu0 0
          %1338 = vmatpush1.bf16.msra.mxu0 0
          %1339 = vmatprep.subr.bf16.mxu0 0
          %1340 = vmatpush1.bf16.msra.mxu0 0
          %1341 = vmatprep.subr.bf16.mxu0 0
          %1342 = vmatpush1.bf16.msra.mxu0 0
          %1343 = vmatprep.subr.bf16.mxu0 0
          %1344 = vmatpush1.bf16.msra.mxu0 0
          %1345 = vmatprep.subr.bf16.mxu0 0
          %1346 = vmatpush1.bf16.msra.mxu0 0
          %1347 = vmatprep.subr.bf16.mxu0 0
          %1348 = vmatpush1.bf16.msra.mxu0 0
          %1349 = vmatprep.subr.bf16.mxu0 0
          %1350 = vmatpush1.bf16.msra.mxu0 0
          %1351 = vmatprep.mubr.bf16.mxu0 0
          %1352 = vmatmul.mubr.bf16.gmra.mrb[0].mxu0 %v1317
          %v1353 = vpop.f32.mrb[0].mxu0
          %v1354 = vadd.f32 %v1290, %v1353
          %v1355 = vpop.f32.mrb[0].mxu0
          %v1356 = vpop.f32.mrb[0].mxu0
          %v1357 = vpop.f32.mrb[0].mxu0
          %1358 = vdwg.mxu0
          %v1359 = vadd.f32 %v863, %v1354
          %1360 = vst.msk [vmem:[#allocation2] sm:$0xf] %vm866, %v1359
          %v1361 = vld [vmem:[#allocation20] sm:$0x1]
          %v1362 = vld [vmem:[#allocation22] sm:$0x1]
          %v1363 = vsel %vm866, %v1359, 0.0
          %1364 = vadd.xlane.f32.xlu0 %v1363
          %v1365 = vpop.xlane.xlu0 %1364
          %v1366 = vmul.f32 %v1365, %v870
          %v1367 = vmul.f32 %v1359, %v1359
          %v1368 = vsel %vm866, %v1367, 0.0
          %1369 = vadd.xlane.f32.xlu0 %v1368
          %v1370 = vpop.xlane.xlu0 %1369
          %v1371 = vmul.f32 %v1370, %v870
          %v1372 = vmul.f32 %v1366, %v1366
          %v1373 = vsub.f32 %v1371, %v1372
          %v1374 = vsub.f32 %v1359, %v1366
          %v1375 = vadd.f32 %v1373, 1e-05
          %v1376 = vrsqrt.pop %v1375
          %v1377 = vmul.f32 %v1374, %v1376
          %v1379 = vlaneseq
          %v1380 = vshrl.u32 %v1379, 7
          %v1381 = vsub.s32 0, %v1380
          %v1382 = vrot.slane %v1361, %v1381
          %v1384 = vmul.f32 %v1377, %v1382
          %v1386 = vlaneseq
          %v1387 = vshrl.u32 %v1386, 7
          %v1388 = vsub.s32 0, %v1387
          %v1389 = vrot.slane %v1362, %v1388
          %v1391 = vadd.f32 %v1384, %v1389
          %1392 = vst.msk [vmem:[#allocation3] sm:$0xf] %vm866, %v1391
          %1393 = vst.msk [vmem:[#allocation4] sm:$0xf] %vm866, 0.0
        $region144: #{tpu_custom_call.1} parent=79 // pred_fallthru
          _
        %v1394 = vld [vmem:[#allocation3] sm:$0xf]
        %v1395 = vpack.c.bf16 %v1394, %v1394
        %v1396 = vld [vmem:[%s758] sm:$0xf]
        %v1397 = vld [vmem:[%s758 + $0x4] sm:$0xf]
        %v1398 = vld [vmem:[%s758 + $0x8] sm:$0xf]
        %v1399 = vld [vmem:[%s758 + $0xc] sm:$0xf]
        %v1400 = vld [vmem:[%s758 + $0x10] sm:$0xf]
        %v1401 = vld [vmem:[%s758 + $0x14] sm:$0xf]
        %v1402 = vld [vmem:[%s758 + $0x18] sm:$0xf]
        %v1403 = vld [vmem:[%s758 + $0x1c] sm:$0xf]
        %v1404 = vld [vmem:[%s766] sm:$0x1]
        %v1406 = vlaneseq
        %v1407 = vshrl.u32 %v1406, 7
        %v1408 = vsub.s32 0, %v1407
        %v1409 = vrot.slane %v1404, %v1408
        %v1419 = vunpack.c.l.b16 %v1396
        %v1420 = vunpack.c.l.b16 %v1397
        %v1421 = vunpack.c.l.b16 %v1398
        %v1422 = vunpack.c.l.b16 %v1399
        %v1423 = vunpack.c.l.b16 %v1400
        %v1424 = vunpack.c.l.b16 %v1401
        %v1425 = vunpack.c.l.b16 %v1402
        %v1426 = vunpack.c.l.b16 %v1403
        %v1427 = vpack.c.b16 %v1420, %v1419
        %v1428 = vpack.c.b16 %v1422, %v1421
        %v1429 = vpack.c.b16 %v1424, %v1423
        %v1430 = vpack.c.b16 %v1426, %v1425
        %vm1435 = vcmask 523264
        %v1437 = vsel %vm1435, %v1395, 0
        %1439 = vmatprep.subr.bf16.mxu0 0
        %1440 = vmatpush1.bf16.msra.mxu0 %v1427
        %1441 = vmatprep.subr.bf16.mxu0 0
        %1442 = vmatpush1.bf16.msra.mxu0 %v1428
        %1443 = vmatprep.subr.bf16.mxu0 0
        %1444 = vmatpush1.bf16.msra.mxu0 %v1429
        %1445 = vmatprep.subr.bf16.mxu0 0
        %1446 = vmatpush1.bf16.msra.mxu0 %v1430
        %1447 = vmatprep.subr.bf16.mxu0 0
        %1448 = vmatpush1.bf16.msra.mxu0 0
        %1449 = vmatprep.subr.bf16.mxu0 0
        %1450 = vmatpush1.bf16.msra.mxu0 0
        %1451 = vmatprep.subr.bf16.mxu0 0
        %1452 = vmatpush1.bf16.msra.mxu0 0
        %1453 = vmatprep.subr.bf16.mxu0 0
        %1454 = vmatpush1.bf16.msra.mxu0 0
        %1455 = vmatprep.subr.bf16.mxu0 0
        %1456 = vmatpush1.bf16.msra.mxu0 0
        %1457 = vmatprep.subr.bf16.mxu0 0
        %1458 = vmatpush1.bf16.msra.mxu0 0
        %1459 = vmatprep.subr.bf16.mxu0 0
        %1460 = vmatpush1.bf16.msra.mxu0 0
        %1461 = vmatprep.subr.bf16.mxu0 0
        %1462 = vmatpush1.bf16.msra.mxu0 0
        %1463 = vmatprep.subr.bf16.mxu0 0
        %1464 = vmatpush1.bf16.msra.mxu0 0
        %1465 = vmatprep.subr.bf16.mxu0 0
        %1466 = vmatpush1.bf16.msra.mxu0 0
        %1467 = vmatprep.subr.bf16.mxu0 0
        %1468 = vmatpush1.bf16.msra.mxu0 0
        %1469 = vmatprep.subr.bf16.mxu0 0
        %1470 = vmatpush1.bf16.msra.mxu0 0
        %1471 = vmatprep.mubr.bf16.mxu0 0
        %1472 = vmatmul.mubr.bf16.gmra.mrb[0].mxu0 %v1437
        %v1473 = vpop.f32.mrb[0].mxu0
        %v1474 = vadd.f32 %v1409, %v1473
        %v1475 = vpop.f32.mrb[0].mxu0
        %v1476 = vpop.f32.mrb[0].mxu0
        %v1477 = vpop.f32.mrb[0].mxu0
        %1478 = vdwg.mxu0
        %v1479 = vmul.f32 %v1474, %v1474
        %v1480 = vmul.f32 %v1474, %v1479
        %v1481 = vmul.f32 %v1480, 0.044715
        %v1482 = vadd.f32 %v1474, %v1481
        %v1483 = vmul.f32 %v1482, 0.7978846
        %v1484 = vtanh.pop %v1483
        %v1485 = vadd.f32 %v1484, 1.0
        %v1486 = vmul.f32 %v1485, 0.5
        %v1487 = vmul.f32 %v1474, %v1486
        %v1488 = vld [vmem:[#allocation4] sm:$0xf]
        %v1489 = vpack.c.bf16 %v1487, %v1487
        %v1490 = vld [vmem:[%s775] sm:$0xf]
        %v1491 = vld [vmem:[%s775 + $0x4] sm:$0xf]
        %v1492 = vld [vmem:[%s775 + $0x8] sm:$0xf]
        %v1493 = vld [vmem:[%s775 + $0xc] sm:$0xf]
        %v1494 = vld [vmem:[%s775 + $0x10] sm:$0xf]
        %v1495 = vld [vmem:[%s775 + $0x14] sm:$0xf]
        %v1496 = vld [vmem:[%s775 + $0x18] sm:$0xf]
        %v1497 = vld [vmem:[%s775 + $0x1c] sm:$0xf]
        %v1498 = vld [vmem:[%s775 + $0x20] sm:$0xf]
        %v1499 = vld [vmem:[%s775 + $0x24] sm:$0xf]
        %v1500 = vld [vmem:[%s775 + $0x28] sm:$0xf]
        %v1501 = vld [vmem:[%s775 + $0x2c] sm:$0xf]
        %v1502 = vld [vmem:[%s775 + $0x30] sm:$0xf]
        %v1503 = vld [vmem:[%s775 + $0x34] sm:$0xf]
        %v1504 = vld [vmem:[%s775 + $0x38] sm:$0xf]
        %v1505 = vld [vmem:[%s775 + $0x3c] sm:$0xf]
        %v1522 = vunpack.c.l.b16 %v1490
        %v1523 = vunpack.c.l.b16 %v1491
        %v1524 = vunpack.c.l.b16 %v1492
        %v1525 = vunpack.c.l.b16 %v1493
        %v1526 = vunpack.c.l.b16 %v1494
        %v1527 = vunpack.c.l.b16 %v1495
        %v1528 = vunpack.c.l.b16 %v1496
        %v1529 = vunpack.c.l.b16 %v1497
        %v1530 = vunpack.c.l.b16 %v1498
        %v1531 = vunpack.c.l.b16 %v1499
        %v1532 = vunpack.c.l.b16 %v1500
        %v1533 = vunpack.c.l.b16 %v1501
        %v1534 = vunpack.c.l.b16 %v1502
        %v1535 = vunpack.c.l.b16 %v1503
        %v1536 = vunpack.c.l.b16 %v1504
        %v1537 = vunpack.c.l.b16 %v1505
        %v1538 = vpack.c.b16 %v1523, %v1522
        %v1539 = vpack.c.b16 %v1525, %v1524
        %v1540 = vpack.c.b16 %v1527, %v1526
        %v1541 = vpack.c.b16 %v1529, %v1528
        %v1542 = vpack.c.b16 %v1531, %v1530
        %v1543 = vpack.c.b16 %v1533, %v1532
        %v1544 = vpack.c.b16 %v1535, %v1534
        %v1545 = vpack.c.b16 %v1537, %v1536
        %1554 = vmatprep.subr.bf16.mxu0 0
        %1555 = vmatpush1.bf16.msra.mxu0 %v1538
        %1556 = vmatprep.subr.bf16.mxu0 0
        %1557 = vmatpush1.bf16.msra.mxu0 %v1539
        %1558 = vmatprep.subr.bf16.mxu0 0
        %1559 = vmatpush1.bf16.msra.mxu0 %v1540
        %1560 = vmatprep.subr.bf16.mxu0 0
        %1561 = vmatpush1.bf16.msra.mxu0 %v1541
        %1562 = vmatprep.subr.bf16.mxu0 0
        %1563 = vmatpush1.bf16.msra.mxu0 %v1542
        %1564 = vmatprep.subr.bf16.mxu0 0
        %1565 = vmatpush1.bf16.msra.mxu0 %v1543
        %1566 = vmatprep.subr.bf16.mxu0 0
        %1567 = vmatpush1.bf16.msra.mxu0 %v1544
        %1568 = vmatprep.subr.bf16.mxu0 0
        %1569 = vmatpush1.bf16.msra.mxu0 %v1545
        %1570 = vmatprep.subr.bf16.mxu0 0
        %1571 = vmatpush1.bf16.msra.mxu0 0
        %1572 = vmatprep.subr.bf16.mxu0 0
        %1573 = vmatpush1.bf16.msra.mxu0 0
        %1574 = vmatprep.subr.bf16.mxu0 0
        %1575 = vmatpush1.bf16.msra.mxu0 0
        %1576 = vmatprep.subr.bf16.mxu0 0
        %1577 = vmatpush1.bf16.msra.mxu0 0
        %1578 = vmatprep.subr.bf16.mxu0 0
        %1579 = vmatpush1.bf16.msra.mxu0 0
        %1580 = vmatprep.subr.bf16.mxu0 0
        %1581 = vmatpush1.bf16.msra.mxu0 0
        %1582 = vmatprep.subr.bf16.mxu0 0
        %1583 = vmatpush1.bf16.msra.mxu0 0
        %1584 = vmatprep.subr.bf16.mxu0 0
        %1585 = vmatpush1.bf16.msra.mxu0 0
        %1586 = vmatprep.mubr.bf16.mxu0 0
        %1587 = vmatmul.mubr.bf16.gmra.mrb[0].mxu0 %v1489
        %v1588 = vpop.f32.mrb[0].mxu0
        %v1589 = vadd.f32 0.0, %v1588
        %v1590 = vpop.f32.mrb[0].mxu0
        %v1591 = vpop.f32.mrb[0].mxu0
        %v1592 = vpop.f32.mrb[0].mxu0
        %1593 = vdwg.mxu0
        %v1594 = vadd.f32 %v1488, %v1589
        %vm1595 = vcmask 519168
        %1596 = vst.msk [vmem:[#allocation4] sm:$0xf] %vm1595, %v1594
        %p1597 = scmp.eq.s32.totalorder %s55, 1
        // Predicated region
        $region145: #{tpu_custom_call.1} parent=79 // pred_check
          %p1598 = pneg %p1597
        $region146: #{tpu_custom_call.1} parent=79 // pred_check_branch
          %1600 = sbr.rel (%p1598) target = $region148
        $region147: #{tpu_custom_call.1} parent=79 // pred_region
          %v1601 = vld [vmem:[#allocation2] sm:$0xf]
          %v1602 = vld [vmem:[#allocation4] sm:$0xf]
          %v1603 = vadd.f32 %v1601, %v1602
          %v1604 = vld [vmem:[#allocation28] sm:$0x1]
          %v1606 = vlaneseq
          %v1607 = vshrl.u32 %v1606, 7
          %v1608 = vsub.s32 0, %v1607
          %v1609 = vrot.slane %v1604, %v1608
          %v1611 = vadd.f32 %v1603, %v1609
          %1612 = vst.msk [vmem:[%s849] sm:$0xf] %vm1595, %v1611
        $region148: #{tpu_custom_call.1} parent=79 // pred_fallthru
          _
        %s1613 = sand.u32 %s415, 1
        %s1614 = scalar_lea.sflag [#allocation7], %s1613
        %s1615 = sand.u32 %s415, 1
        %s1616 = smul.addr %s1615, 4
        %s1617 = scalar_lea.vmem [#allocation29], %s1616
        %s1618 = sand.u32 %s441, 1
        %s1619 = scalar_lea.sflag [#allocation31], %s1618
        %s1620 = sand.u32 %s441, 1
        %s1621 = smul.addr %s1620, 16
        %s1622 = scalar_lea.vmem [#allocation30], %s1621
        // Predicated region
        $region149: #{tpu_custom_call.1} parent=79 // pred_check
          %p1623 = pneg %p425
        $region150: #{tpu_custom_call.1} parent=79 // pred_check_branch
          %1625 = sbr.rel (%p1623) target = $region152
        $region151: #{tpu_custom_call.1} parent=79 // pred_region
          %s1627 = ssub.s32 64, 64
          %1628 = vsyncadd %s1614, %s1627
          %s1629 = smul.addr %s54, 64
          %s1630 = scalar_lea.hbm %s15, %s1629
          %s1632 = sshll.u32 %s1617, 4
          %s1633 = int_to_ptr.vmem [resolvable:$true] %s1632
          %1635 = dma.vmem_to_hbm [thread:$0]  %s1633, 64, %s1630, %s1614
        $region152: #{tpu_custom_call.1} parent=79 // pred_fallthru
          _
        // Predicated region
        $region153: #{tpu_custom_call.1} parent=79 // pred_check
          %p1636 = pneg %p451
        $region154: #{tpu_custom_call.1} parent=79 // pred_check_branch
          %1638 = sbr.rel (%p1636) target = $region156
        $region155: #{tpu_custom_call.1} parent=79 // pred_region
          %s1640 = ssub.s32 256, 256
          %1641 = vsyncadd %s1619, %s1640
          %s1642 = smul.addr %s54, 2
          %s1643 = smul.addr %s1642, 128
          %s1644 = scalar_lea.hbm %s16, %s1643
          %s1645 = sshll.u32 %s1622, 4
          %s1646 = int_to_ptr.vmem [resolvable:$true] %s1645
          %1651 = dma.vmem_to_hbm [thread:$0]  %s1646, 256, %s1644, %s1619, 128, 128, 8
        $region156: #{tpu_custom_call.1} parent=79 // pred_fallthru
          _
      $region80: #{tpu_custom_call.1} parent=5 // pred_fallthru
        _
      %p1652 = scmp.le.s32.totalorder 2, %s45
      // Predicated region
      $region157: #{tpu_custom_call.1} parent=5 // pred_check
        %p1653 = pneg %p1652
      $region158: #{tpu_custom_call.1} parent=5 // pred_check_branch
        %1655 = sbr.rel (%p1653) target = $region160
      $region159: #{tpu_custom_call.1} parent=5 // pred_region
        %s1656 = ssub.s32 %s45, 2
        // Predicated region
        $region161: #{tpu_custom_call.1} parent=159 // pred_check
          %p1657 = pneg %p431
        $region162: #{tpu_custom_call.1} parent=159 // pred_check_branch
          %1659 = sbr.rel (%p1657) target = $region164
        $region163: #{tpu_custom_call.1} parent=159 // pred_region
          %s1660 = sand.u32 %s416, 1
          %s1661 = scalar_lea.sflag [#allocation7], %s1660
          %s1662 = sand.u32 %s416, 1
          %s1663 = smul.addr %s1662, 4
          %s1664 = scalar_lea.vmem [#allocation29], %s1663
          %1665 = dma.done %s1661, 64
        $region164: #{tpu_custom_call.1} parent=159 // pred_fallthru
          _
        // Predicated region
        $region165: #{tpu_custom_call.1} parent=159 // pred_check
          %p1666 = pneg %p457
        $region166: #{tpu_custom_call.1} parent=159 // pred_check_branch
          %1668 = sbr.rel (%p1666) target = $region168
        $region167: #{tpu_custom_call.1} parent=159 // pred_region
          %s1669 = sand.u32 %s442, 1
          %s1670 = scalar_lea.sflag [#allocation31], %s1669
          %s1671 = sand.u32 %s442, 1
          %s1672 = smul.addr %s1671, 16
          %s1673 = scalar_lea.vmem [#allocation30], %s1672
          %1674 = dma.done %s1670, 256
        $region168: #{tpu_custom_call.1} parent=159 // pred_fallthru
          _
      $region160: #{tpu_custom_call.1} parent=5 // pred_fallthru
        _
    $region6: #{tpu_custom_call.1} parent=1 // loop_footer
      %s49 = sadd.s32 1, %s45
    $region7: #{tpu_custom_call.1} parent=1 // loop_footer_branch
      %44 = sbr.rel target = $region3
    $region8: #{tpu_custom_call.1} parent=1 // loop_exit
      _
    %1675 = vsyncpa [#allocation6], 1
    %s1676 = scalar_lea.sflag [#allocation6], 1
    %1677 = vsyncpa %s1676, 1
    %1678 = vsyncpa [#allocation9], 1
    %s1679 = scalar_lea.sflag [#allocation9], 1
    %1680 = vsyncpa %s1679, 1
    %1681 = vsyncpa [#allocation12], 1
    %1682 = vsyncpa [#allocation15], 1
    %1683 = vsyncpa [#allocation18], 1
    %1684 = vsyncpa [#allocation21], 1
    %1685 = vsyncpa [#allocation24], 1
    %s1686 = scalar_lea.sflag [#allocation24], 1
    %1687 = vsyncpa %s1686, 1
    %1688 = vsyncpa [#allocation27], 1
    %s1689 = scalar_lea.sflag [#allocation27], 1
    %1690 = vsyncpa %s1689, 1
    %1691 = vsyncpa [#allocation7], 1
    %s1692 = scalar_lea.sflag [#allocation7], 1
    %1693 = vsyncpa %s1692, 1
    %1694 = vsyncpa [#allocation31], 1
    %s1695 = scalar_lea.sflag [#allocation31], 1
    %1696 = vsyncpa %s1695, 1

</llo_original>
